<compile_context>
chip_gen: v5e
topology: v5e:2x2
jax: 0.10.0
libtpu: 0.0.40
codegen_flags: <defaults>
</compile_context>

<pallas_src>
import math

import jax
import jax.numpy as jnp
from jax.experimental import pallas as pl
from jax.experimental.pallas import tpu as pltpu


MODEL_CFG = dict(in_channels=4, hidden_channels=32, out_channels=1,
                 n_modes=(4, 4), n_layers=2, projection_channels=64,
                 factorization=None, rank=0.5)


# ------------------------ generation-aware tiling ---------------------------

def _vmem_capacity_bytes():
    try:
        return int(pltpu.get_tpu_info().vmem_capacity_bytes)
    except Exception:
        return 64 << 20  # conservative fallback (v7x per-core VMEM)


def _streaming_max_cols(rows_resident, frac=0.25, cap_cols=16384):
    """Largest f32 column count such that `rows_resident` rows, double
    buffered, stay within `frac` of this generation's VMEM."""
    budget = int(_vmem_capacity_bytes() * frac)
    cols = budget // (max(rows_resident, 1) * 4 * 2)
    cols = (cols // 128) * 128
    return int(min(max(cols, 256), cap_cols))


def _col_tile(p, max_cols, prefer_split=True):
    """Largest 128-multiple divisor of p that is <= max_cols (and <= p//2 when
    prefer_split, so v7x's second TensorCore gets at least one grid step)."""
    if p <= 128:
        return p
    target = min(max_cols, p)
    if prefer_split and p >= 256:
        target = min(target, p // 2)
    t = max(128, (target // 128) * 128)
    while t >= 128:
        if p % t == 0:
            return t
        t -= 128
    return p  # no 128-multiple divisor; fall back to one resident tile


def _compiler_params(sem, tile_bytes):
    limit = int(min(max(4 * tile_bytes + (2 << 20), 16 << 20),
                    int(0.75 * _vmem_capacity_bytes())))
    return pltpu.CompilerParams(dimension_semantics=sem,
                                vmem_limit_bytes=limit)


# --------------------------- in-kernel helpers ------------------------------

def _erf(x):
    # Abramowitz & Stegun 7.1.26. The divide goes to the EUP (approx recip)
    # since the epilogue kernel is VALU-slot bound and the EUP is idle.
    ax = jnp.abs(x)
    t = pl.reciprocal(1.0 + 0.3275911 * ax, approx=True)
    poly = t * (0.254829592 + t * (-0.284496736 + t * (1.421413741
               + t * (-1.453152027 + t * 1.061405429))))
    y = 1.0 - poly * jnp.exp(-ax * ax)
    return jnp.where(x >= 0.0, y, -y)


def _gelu_exact(x):
    # Matches torch.nn.GELU() default (erf form).
    return 0.5 * x * (1.0 + _erf(x * (1.0 / math.sqrt(2.0))))


# ------------------------------ Pallas kernels ------------------------------

def _conv1x1_kernel(w_ref, x_ref, b_ref, o_ref):
    # (Co,Ci) @ (Ci,tp) + (Co,1) -> lane-dense (Co,tp)
    o_ref[...] = (jnp.dot(w_ref[...], x_ref[...],
                          preferred_element_type=jnp.float32) + b_ref[...])


def _fourier_layer_kernel(h_ref, spec_ref, w_ref, b_ref, o_ref):
    # Fused FourierLayer2d epilogue: gelu(skip(h) + spectral(h)) + h
    h = h_ref[...]
    skip = jnp.dot(w_ref[...], h, preferred_element_type=jnp.float32) + b_ref[...]
    o_ref[...] = _gelu_exact(skip + spec_ref[...]) + h


def _projection_kernel(h_ref, w1_ref, b1_ref, w2_ref, b2_ref, o_ref):
    # Fused projection head: conv1x1 -> ReLU -> conv1x1
    t = (jnp.dot(w1_ref[...], h_ref[...],
                 preferred_element_type=jnp.float32) + b1_ref[...])
    t = jnp.maximum(t, 0.0)
    o_ref[...] = (jnp.dot(w2_ref[...], t,
                          preferred_element_type=jnp.float32) + b2_ref[...])


# ------------------------------ kernel wrappers -----------------------------

def lifting(x_bcp, w, b):
    """Lifting 1x1 conv fused with the NCHW -> (C, B*HW) layout conversion.

    x_bcp: (B, Cin, HW) view of the NCHW input (free reshape). The batch axis
    of the grid + the output index_map perform the transpose, so no separate
    XLA transpose / extra activation pass is needed.
    """
    bn, ci, hw = x_bcp.shape
    co = w.shape[0]
    max_cols = _streaming_max_cols(ci + co)
    tp = _col_tile(hw, max_cols, prefer_split=False)  # batch axis already >=2 steps
    nj = hw // tp
    tile_bytes = (ci + co) * tp * 4
    return pl.pallas_call(
        _conv1x1_kernel,
        out_shape=jax.ShapeDtypeStruct((co, bn * hw), jnp.float32),
        grid=(bn, nj),
        in_specs=[pl.BlockSpec((co, ci), lambda bi, j: (0, 0)),
                  pl.BlockSpec((None, ci, tp), lambda bi, j: (bi, 0, j)),
                  pl.BlockSpec((co, 1), lambda bi, j: (0, 0))],
        out_specs=pl.BlockSpec((co, tp), lambda bi, j: (0, bi * nj + j)),
        compiler_params=_compiler_params(("parallel", "parallel"), tile_bytes),
    )(w, x_bcp, b)


def fourier_layer_epilogue(h, spec, w, b):
    """out = gelu(W@h + b + spec) + h, fused in one call. (C, P) layout."""
    c, p = h.shape
    # vreg pressure: h, spec, matmul result and erf temporaries live together,
    # so keep this kernel's tile at <= 1024 columns.
    max_cols = min(_streaming_max_cols(3 * c), 1024)
    tp = _col_tile(p, max_cols)
    tile_bytes = 3 * c * tp * 4
    return pl.pallas_call(
        _fourier_layer_kernel,
        out_shape=jax.ShapeDtypeStruct((c, p), jnp.float32),
        grid=(p // tp,),
        in_specs=[pl.BlockSpec((c, tp), lambda i: (0, i)),
                  pl.BlockSpec((c, tp), lambda i: (0, i)),
                  pl.BlockSpec((c, c), lambda i: (0, 0)),
                  pl.BlockSpec((c, 1), lambda i: (0, 0))],
        out_specs=pl.BlockSpec((c, tp), lambda i: (0, i)),
        compiler_params=_compiler_params(("parallel",), tile_bytes),
    )(h, spec, w, b)


def projection_head(h, w1, b1, w2, b2):
    """relu(W1@h + b1) then W2@(.) + b2, fused. Output (Cout, P) lane-dense."""
    ch, p = h.shape
    cp = w1.shape[0]
    co = w2.shape[0]
    max_cols = _streaming_max_cols(ch + cp + co)
    tp = _col_tile(p, max_cols)
    tile_bytes = (ch + cp + co) * tp * 4
    return pl.pallas_call(
        _projection_kernel,
        out_shape=jax.ShapeDtypeStruct((co, p), jnp.float32),
        grid=(p // tp,),
        in_specs=[pl.BlockSpec((ch, tp), lambda i: (0, i)),
                  pl.BlockSpec((cp, ch), lambda i: (0, 0)),
                  pl.BlockSpec((cp, 1), lambda i: (0, 0)),
                  pl.BlockSpec((co, cp), lambda i: (0, 0)),
                  pl.BlockSpec((co, 1), lambda i: (0, 0))],
        out_specs=pl.BlockSpec((co, tp), lambda i: (0, i)),
        compiler_params=_compiler_params(("parallel",), tile_bytes),
    )(h, w1, b1, w2, b2)


# ------------------------------- model pieces -------------------------------

def init_params(key, cfg=MODEL_CFG):
    cin = cfg["in_channels"]
    ch = cfg["hidden_channels"]
    cproj = cfg["projection_channels"]
    cout = cfg["out_channels"]
    m1, m2 = cfg["n_modes"]
    L = cfg["n_layers"]

    keys = iter(jax.random.split(key, 3 + 2 * L))

    def conv_init(k, ci, co):
        # torch Conv2d(k=1) default: U(-1/sqrt(ci), 1/sqrt(ci))
        bound = 1.0 / math.sqrt(ci)
        kw, kb = jax.random.split(k)
        w = jax.random.uniform(kw, (co, ci), jnp.float32, -bound, bound)
        b = jax.random.uniform(kb, (co, 1), jnp.float32, -bound, bound)
        return w, b

    p = {}
    p["lift_w"], p["lift_b"] = conv_init(next(keys), cin, ch)
    for l in range(L):
        scale = 1.0 / (ch * ch)
        kr, ki = jax.random.split(next(keys))
        p[f"spec{l}_wr"] = scale * jax.random.normal(kr, (2 * m1, m2, ch, ch),
                                                     jnp.float32)
        p[f"spec{l}_wi"] = scale * jax.random.normal(ki, (2 * m1, m2, ch, ch),
                                                     jnp.float32)
        p[f"skip{l}_w"], p[f"skip{l}_b"] = conv_init(next(keys), ch, ch)
    p["proj1_w"], p["proj1_b"] = conv_init(next(keys), ch, cproj)
    p["proj2_w"], p["proj2_b"] = conv_init(next(keys), cproj, cout)
    return p


def spectral_conv2d(h_flat, wr, wi, B, H, W, m1, m2):
    """Dense spectral conv (factorization=None) in (C, B*H*W) layout.

    The complex channel mixing runs as one XLA einsum in the (C,B,2m1,m2)
    corner layout so it fuses with the corner gather and the pad, instead of
    round-tripping a badly-padded (M,B,C) tensor through a Pallas kernel.
    """
    C = h_flat.shape[0]
    Co = wr.shape[-1]
    Wf = W // 2 + 1
    x_sp = h_flat.reshape(C, B, H, W)  # free reshape (memory order c,b,h,w)
    # TODO(synk): rfft2/irfft2 have no Pallas equivalent; they run in XLA.
    x_ft = jnp.fft.rfft2(x_sp, axes=(-2, -1))                      # (C,B,H,Wf)
    blk = jnp.concatenate([x_ft[:, :, :m1, :m2],
                           x_ft[:, :, H - m1:, :m2]], axis=2)      # (C,B,2m1,m2)
    w_c = (wr + 1j * wi).astype(jnp.complex64)                     # (2m1,m2,Ci,Co)
    out_blk = jnp.einsum("ibhw,hwio->obhw", blk, w_c)              # (Co,B,2m1,m2)
    mid = jnp.zeros((Co, B, H - 2 * m1, m2), jnp.complex64)
    out_low = jnp.concatenate([out_blk[:, :, :m1, :], mid,
                               out_blk[:, :, m1:, :]], axis=2)     # (Co,B,H,m2)
    out_ft = jnp.pad(out_low, ((0, 0), (0, 0), (0, 0), (0, Wf - m2)))
    out = jnp.fft.irfft2(out_ft, s=(H, W), axes=(-2, -1))
    return out.reshape(Co, B * H * W).astype(jnp.float32)


def fno_reg_forward(params, x, y, cfg=MODEL_CFG):
    # FNOReg.forward: concat -> lifting -> encoder -> fno_blocks -> decoder -> projection
    x_in = jnp.concatenate([x, y], axis=1)                         # (B,Cin,H,W)
    B, Cin, H, W = x_in.shape
    HW = H * W
    m1, m2 = cfg["n_modes"]

    # lifting (1x1 conv); NCHW -> (Chid, B*HW) conversion fused into the kernel
    h = lifting(x_in.reshape(B, Cin, HW), params["lift_w"], params["lift_b"])

    # TODO(synk): FFCResNetBlock encoder internals not given in the spec;
    # treated as identity here.

    # FourierLayer2d blocks: h = gelu(skip(h) + spectral(h)) + h
    for l in range(cfg["n_layers"]):
        spec = spectral_conv2d(h, params[f"spec{l}_wr"], params[f"spec{l}_wi"],
                               B, H, W, m1, m2)                    # (Chid, P)
        h = fourier_layer_epilogue(h, spec,
                                   params[f"skip{l}_w"], params[f"skip{l}_b"])

    # TODO(synk): FFCResNetBlock decoder internals not given in the spec;
    # treated as identity here.

    # projection head: conv1x1 -> ReLU -> conv1x1 (fused)
    out = projection_head(h, params["proj1_w"], params["proj1_b"],
                          params["proj2_w"], params["proj2_b"])    # (Cout, P)
    Cout = out.shape[0]
    return jnp.transpose(out.reshape(Cout, B, H, W), (1, 0, 2, 3))


if __name__ == "__main__":
    key = jax.random.PRNGKey(0)
    kx, ky = jax.random.split(key)
    # x and y each contribute 2 channels; concat -> in_channels = 4.
    x = jax.random.normal(kx, (2, 2, 16, 16), jnp.float32)
    y = jax.random.normal(ky, (2, 2, 16, 16), jnp.float32)

    params = init_params(jax.random.PRNGKey(1), MODEL_CFG)

    fwd = jax.jit(lambda p, a, b: fno_reg_forward(p, a, b))
    out = jax.block_until_ready(fwd(params, x, y))

    assert out.shape == (2, MODEL_CFG["out_channels"], 16, 16), out.shape
    assert out.dtype == jnp.float32
    assert bool(jnp.all(jnp.isfinite(out)))
    print("KERNEL_OK")
</pallas_src>

<mosaic_0001>
module attributes {stable_mosaic.version = 11 : i64} {
  func.func @_conv1x1_kernel(%arg0: i32, %arg1: i32, %arg2: memref<32x4xf32, #tpu.memory_space<vmem>>, %arg3: memref<1x4x256xf32, #tpu.memory_space<vmem>>, %arg4: memref<32x1xf32, #tpu.memory_space<vmem>>, %arg5: memref<32x256xf32, #tpu.memory_space<vmem>>) attributes {dimension_semantics = [#tpu.dimension_semantics<parallel>, #tpu.dimension_semantics<parallel>], iteration_bounds = array<i64: 2, 1>, scalar_prefetch = 0 : i64, scratch_operands = 0 : i64, tpu.core_type = #tpu.core_type<tc>, window_params = [{pipeline_mode = #tpu.pipeline_mode<synchronous>, transform_indices = @transform_0, window_bounds = array<i64: 32, 4>}, {transform_indices = @transform_1, window_bounds = array<i64: 1, 4, 256>}, {pipeline_mode = #tpu.pipeline_mode<synchronous>, transform_indices = @transform_2, window_bounds = array<i64: 32, 1>}, {transform_indices = @transform_3, window_bounds = array<i64: 32, 256>}]} {
    %c0 = arith.constant 0 : index
    %c0_0 = arith.constant 0 : index
    %0 = vector.load %arg2[%c0, %c0_0] : memref<32x4xf32, #tpu.memory_space<vmem>>, vector<32x4xf32>
    %c0_1 = arith.constant 0 : index
    %c0_2 = arith.constant 0 : index
    %c0_3 = arith.constant 0 : index
    %1 = vector.load %arg3[%c0_1, %c0_2, %c0_3] : memref<1x4x256xf32, #tpu.memory_space<vmem>>, vector<1x4x256xf32>
    %2 = vector.shape_cast %1 : vector<1x4x256xf32> to vector<4x256xf32>
    %cst = arith.constant dense<0.000000e+00> : vector<32x256xf32>
    %3 = tpu.matmul %0, %2, %cst {dimension_numbers = #tpu.dot_dimension_numbers<[1], [0], [0], [1], [0, 0, 1, 1], [], []>} : vector<32x4xf32>, vector<4x256xf32>, vector<32x256xf32> -> vector<32x256xf32>
    %c0_4 = arith.constant 0 : index
    %c0_5 = arith.constant 0 : index
    %4 = vector.load %arg4[%c0_4, %c0_5] : memref<32x1xf32, #tpu.memory_space<vmem>>, vector<32x1xf32>
    %5 = vector.broadcast %4 : vector<32x1xf32> to vector<32x256xf32>
    %6 = arith.addf %3, %5 : vector<32x256xf32>
    %c0_6 = arith.constant 0 : index
    %c0_7 = arith.constant 0 : index
    %7 = vector.load %arg5[%c0_6, %c0_7] : memref<32x256xf32, #tpu.memory_space<vmem>>, vector<32x256xf32>
    tpu.vector_store %arg5[%c0_6, %c0_7], %6 {strides = array<i32>} : memref<32x256xf32, #tpu.memory_space<vmem>>, vector<32x256xf32>,
    return
  }
  func.func @transform_0(%arg0: i32, %arg1: i32) -> (i32, i32) {
    %c0_i32 = arith.constant 0 : i32
    %c0_i32_0 = arith.constant 0 : i32
    %c0_i32_1 = arith.constant 0 : i32
    return %c0_i32, %c0_i32_0 : i32, i32
  }
  func.func @transform_1(%arg0: i32, %arg1: i32) -> (i32, i32, i32) {
    %c0_i32 = arith.constant 0 : i32
    %c0_i32_0 = arith.constant 0 : i32
    return %arg0, %c0_i32, %arg1 : i32, i32, i32
  }
  func.func @transform_2(%arg0: i32, %arg1: i32) -> (i32, i32) {
    %c0_i32 = arith.constant 0 : i32
    %c0_i32_0 = arith.constant 0 : i32
    %c0_i32_1 = arith.constant 0 : i32
    return %c0_i32, %c0_i32_0 : i32, i32
  }
  func.func @transform_3(%arg0: i32, %arg1: i32) -> (i32, i32) {
    %c1_i32 = arith.constant 1 : i32
    %0 = arith.muli %arg0, %c1_i32 : i32
    %1 = arith.addi %0, %arg1 : i32
    %c0_i32 = arith.constant 0 : i32
    %c0_i32_0 = arith.constant 0 : i32
    return %c0_i32, %1 : i32, i32
  }
}

module attributes {stable_mosaic.version = 11 : i64} {
  func.func @_fourier_layer_kernel(%arg0: i32, %arg1: memref<32x256xf32, #tpu.memory_space<vmem>>, %arg2: memref<32x256xf32, #tpu.memory_space<vmem>>, %arg3: memref<32x32xf32, #tpu.memory_space<vmem>>, %arg4: memref<32x1xf32, #tpu.memory_space<vmem>>, %arg5: memref<32x256xf32, #tpu.memory_space<vmem>>) attributes {dimension_semantics = [#tpu.dimension_semantics<parallel>], iteration_bounds = array<i64: 2>, scalar_prefetch = 0 : i64, scratch_operands = 0 : i64, tpu.core_type = #tpu.core_type<tc>, window_params = [{transform_indices = @transform_0, window_bounds = array<i64: 32, 256>}, {transform_indices = @transform_1, window_bounds = array<i64: 32, 256>}, {pipeline_mode = #tpu.pipeline_mode<synchronous>, transform_indices = @transform_2, window_bounds = array<i64: 32, 32>}, {pipeline_mode = #tpu.pipeline_mode<synchronous>, transform_indices = @transform_3, window_bounds = array<i64: 32, 1>}, {transform_indices = @transform_4, window_bounds = array<i64: 32, 256>}]} {
    %c0 = arith.constant 0 : index
    %c0_0 = arith.constant 0 : index
    %0 = vector.load %arg1[%c0, %c0_0] : memref<32x256xf32, #tpu.memory_space<vmem>>, vector<32x256xf32>
    %c0_1 = arith.constant 0 : index
    %c0_2 = arith.constant 0 : index
    %1 = vector.load %arg3[%c0_1, %c0_2] : memref<32x32xf32, #tpu.memory_space<vmem>>, vector<32x32xf32>
    %cst = arith.constant dense<0.000000e+00> : vector<32x256xf32>
    %2 = tpu.matmul %1, %0, %cst {dimension_numbers = #tpu.dot_dimension_numbers<[1], [0], [0], [1], [0, 0, 1, 1], [], []>} : vector<32x32xf32>, vector<32x256xf32>, vector<32x256xf32> -> vector<32x256xf32>
    %c0_3 = arith.constant 0 : index
    %c0_4 = arith.constant 0 : index
    %3 = vector.load %arg4[%c0_3, %c0_4] : memref<32x1xf32, #tpu.memory_space<vmem>>, vector<32x1xf32>
    %4 = vector.broadcast %3 : vector<32x1xf32> to vector<32x256xf32>
    %5 = arith.addf %2, %4 : vector<32x256xf32>
    %c0_5 = arith.constant 0 : index
    %c0_6 = arith.constant 0 : index
    %6 = vector.load %arg2[%c0_5, %c0_6] : memref<32x256xf32, #tpu.memory_space<vmem>>, vector<32x256xf32>
    %7 = arith.addf %5, %6 : vector<32x256xf32>
    %cst_7 = arith.constant 5.000000e-01 : f32
    %8 = vector.broadcast %cst_7 : f32 to vector<32x256xf32>
    %9 = arith.mulf %8, %7 : vector<32x256xf32>
    %cst_8 = arith.constant 0.707106769 : f32
    %10 = vector.broadcast %cst_8 : f32 to vector<32x256xf32>
    %11 = arith.mulf %7, %10 : vector<32x256xf32>
    %12 = math.absf %11 : vector<32x256xf32>
    %cst_9 = arith.constant 0.327591091 : f32
    %13 = vector.broadcast %cst_9 : f32 to vector<32x256xf32>
    %14 = arith.mulf %13, %12 : vector<32x256xf32>
    %cst_10 = arith.constant 1.000000e+00 : f32
    %15 = vector.broadcast %cst_10 : f32 to vector<32x256xf32>
    %16 = arith.addf %15, %14 : vector<32x256xf32>
    %17 = tpu.reciprocal %16 {approx = true} : vector<32x256xf32> -> vector<32x256xf32>
    %cst_11 = arith.constant 1.06140542 : f32
    %18 = vector.broadcast %cst_11 : f32 to vector<32x256xf32>
    %19 = arith.mulf %17, %18 : vector<32x256xf32>
    %cst_12 = arith.constant -1.45315206 : f32
    %20 = vector.broadcast %cst_12 : f32 to vector<32x256xf32>
    %21 = arith.addf %20, %19 : vector<32x256xf32>
    %22 = arith.mulf %17, %21 : vector<32x256xf32>
    %cst_13 = arith.constant 1.42141378 : f32
    %23 = vector.broadcast %cst_13 : f32 to vector<32x256xf32>
    %24 = arith.addf %23, %22 : vector<32x256xf32>
    %25 = arith.mulf %17, %24 : vector<32x256xf32>
    %cst_14 = arith.constant -0.284496725 : f32
    %26 = vector.broadcast %cst_14 : f32 to vector<32x256xf32>
    %27 = arith.addf %26, %25 : vector<32x256xf32>
    %28 = arith.mulf %17, %27 : vector<32x256xf32>
    %cst_15 = arith.constant 0.254829586 : f32
    %29 = vector.broadcast %cst_15 : f32 to vector<32x256xf32>
    %30 = arith.addf %29, %28 : vector<32x256xf32>
    %31 = arith.mulf %17, %30 : vector<32x256xf32>
    %cst_16 = arith.constant 0.000000e+00 : f32
    %32 = vector.broadcast %cst_16 : f32 to vector<32x256xf32>
    %33 = arith.subf %32, %12 : vector<32x256xf32>
    %34 = arith.mulf %33, %12 : vector<32x256xf32>
    %35 = math.exp %34 : vector<32x256xf32>
    %36 = arith.mulf %31, %35 : vector<32x256xf32>
    %cst_17 = arith.constant 1.000000e+00 : f32
    %37 = vector.broadcast %cst_17 : f32 to vector<32x256xf32>
    %38 = arith.subf %37, %36 : vector<32x256xf32>
    %cst_18 = arith.constant 0.000000e+00 : f32
    %39 = vector.broadcast %cst_18 : f32 to vector<32x256xf32>
    %40 = arith.cmpf oge, %11, %39 : vector<32x256xf32>
    %cst_19 = arith.constant 0.000000e+00 : f32
    %41 = vector.broadcast %cst_19 : f32 to vector<32x256xf32>
    %42 = arith.subf %41, %38 : vector<32x256xf32>
    %43 = arith.select %40, %38, %42 : vector<32x256xi1>, vector<32x256xf32>
    %cst_20 = arith.constant 1.000000e+00 : f32
    %44 = vector.broadcast %cst_20 : f32 to vector<32x256xf32>
    %45 = arith.addf %44, %43 : vector<32x256xf32>
    %46 = arith.mulf %9, %45 : vector<32x256xf32>
    %47 = arith.addf %46, %0 : vector<32x256xf32>
    %c0_21 = arith.constant 0 : index
    %c0_22 = arith.constant 0 : index
    %48 = vector.load %arg5[%c0_21, %c0_22] : memref<32x256xf32, #tpu.memory_space<vmem>>, vector<32x256xf32>
    tpu.vector_store %arg5[%c0_21, %c0_22], %47 {strides = array<i32>} : memref<32x256xf32, #tpu.memory_space<vmem>>, vector<32x256xf32>,
    return
  }
  func.func @transform_0(%arg0: i32) -> (i32, i32) {
    %c0_i32 = arith.constant 0 : i32
    %c0_i32_0 = arith.constant 0 : i32
    return %c0_i32, %arg0 : i32, i32
  }
  func.func @transform_1(%arg0: i32) -> (i32, i32) {
    %c0_i32 = arith.constant 0 : i32
    %c0_i32_0 = arith.constant 0 : i32
    return %c0_i32, %arg0 : i32, i32
  }
  func.func @transform_2(%arg0: i32) -> (i32, i32) {
    %c0_i32 = arith.constant 0 : i32
    %c0_i32_0 = arith.constant 0 : i32
    %c0_i32_1 = arith.constant 0 : i32
    return %c0_i32, %c0_i32_0 : i32, i32
  }
  func.func @transform_3(%arg0: i32) -> (i32, i32) {
    %c0_i32 = arith.constant 0 : i32
    %c0_i32_0 = arith.constant 0 : i32
    %c0_i32_1 = arith.constant 0 : i32
    return %c0_i32, %c0_i32_0 : i32, i32
  }
  func.func @transform_4(%arg0: i32) -> (i32, i32) {
    %c0_i32 = arith.constant 0 : i32
    %c0_i32_0 = arith.constant 0 : i32
    return %c0_i32, %arg0 : i32, i32
  }
}

module attributes {stable_mosaic.version = 11 : i64} {
  func.func @_projection_kernel(%arg0: i32, %arg1: memref<32x256xf32, #tpu.memory_space<vmem>>, %arg2: memref<64x32xf32, #tpu.memory_space<vmem>>, %arg3: memref<64x1xf32, #tpu.memory_space<vmem>>, %arg4: memref<1x64xf32, #tpu.memory_space<vmem>>, %arg5: memref<1x1xf32, #tpu.memory_space<vmem>>, %arg6: memref<1x256xf32, #tpu.memory_space<vmem>>) attributes {dimension_semantics = [#tpu.dimension_semantics<parallel>], iteration_bounds = array<i64: 2>, scalar_prefetch = 0 : i64, scratch_operands = 0 : i64, tpu.core_type = #tpu.core_type<tc>, window_params = [{transform_indices = @transform_0, window_bounds = array<i64: 32, 256>}, {pipeline_mode = #tpu.pipeline_mode<synchronous>, transform_indices = @transform_1, window_bounds = array<i64: 64, 32>}, {pipeline_mode = #tpu.pipeline_mode<synchronous>, transform_indices = @transform_2, window_bounds = array<i64: 64, 1>}, {pipeline_mode = #tpu.pipeline_mode<synchronous>, transform_indices = @transform_3, window_bounds = array<i64: 1, 64>}, {pipeline_mode = #tpu.pipeline_mode<synchronous>, transform_indices = @transform_4, window_bounds = array<i64: 1, 1>}, {transform_indices = @transform_5, window_bounds = array<i64: 1, 256>}]} {
    %c0 = arith.constant 0 : index
    %c0_0 = arith.constant 0 : index
    %0 = vector.load %arg2[%c0, %c0_0] : memref<64x32xf32, #tpu.memory_space<vmem>>, vector<64x32xf32>
    %c0_1 = arith.constant 0 : index
    %c0_2 = arith.constant 0 : index
    %1 = vector.load %arg1[%c0_1, %c0_2] : memref<32x256xf32, #tpu.memory_space<vmem>>, vector<32x256xf32>
    %cst = arith.constant dense<0.000000e+00> : vector<64x256xf32>
    %2 = tpu.matmul %0, %1, %cst {dimension_numbers = #tpu.dot_dimension_numbers<[1], [0], [0], [1], [0, 0, 1, 1], [], []>} : vector<64x32xf32>, vector<32x256xf32>, vector<64x256xf32> -> vector<64x256xf32>
    %c0_3 = arith.constant 0 : index
    %c0_4 = arith.constant 0 : index
    %3 = vector.load %arg3[%c0_3, %c0_4] : memref<64x1xf32, #tpu.memory_space<vmem>>, vector<64x1xf32>
    %4 = vector.broadcast %3 : vector<64x1xf32> to vector<64x256xf32>
    %5 = arith.addf %2, %4 : vector<64x256xf32>
    %cst_5 = arith.constant 0.000000e+00 : f32
    %6 = vector.broadcast %cst_5 : f32 to vector<64x256xf32>
    %7 = arith.maximumf %5, %6 : vector<64x256xf32>
    %c0_6 = arith.constant 0 : index
    %c0_7 = arith.constant 0 : index
    %8 = vector.load %arg4[%c0_6, %c0_7] : memref<1x64xf32, #tpu.memory_space<vmem>>, vector<1x64xf32>
    %cst_8 = arith.constant dense<0.000000e+00> : vector<1x256xf32>
    %9 = tpu.matmul %8, %7, %cst_8 {dimension_numbers = #tpu.dot_dimension_numbers<[1], [0], [0], [1], [0, 0, 1, 1], [], []>} : vector<1x64xf32>, vector<64x256xf32>, vector<1x256xf32> -> vector<1x256xf32>
    %c0_9 = arith.constant 0 : index
    %c0_10 = arith.constant 0 : index
    %10 = vector.load %arg5[%c0_9, %c0_10] : memref<1x1xf32, #tpu.memory_space<vmem>>, vector<1x1xf32>
    %11 = vector.broadcast %10 : vector<1x1xf32> to vector<1x256xf32>
    %12 = arith.addf %9, %11 : vector<1x256xf32>
    %c0_11 = arith.constant 0 : index
    %c0_12 = arith.constant 0 : index
    %13 = vector.load %arg6[%c0_11, %c0_12] : memref<1x256xf32, #tpu.memory_space<vmem>>, vector<1x256xf32>
    tpu.vector_store %arg6[%c0_11, %c0_12], %12 {strides = array<i32>} : memref<1x256xf32, #tpu.memory_space<vmem>>, vector<1x256xf32>,
    return
  }
  func.func @transform_0(%arg0: i32) -> (i32, i32) {
    %c0_i32 = arith.constant 0 : i32
    %c0_i32_0 = arith.constant 0 : i32
    return %c0_i32, %arg0 : i32, i32
  }
  func.func @transform_1(%arg0: i32) -> (i32, i32) {
    %c0_i32 = arith.constant 0 : i32
    %c0_i32_0 = arith.constant 0 : i32
    %c0_i32_1 = arith.constant 0 : i32
    return %c0_i32, %c0_i32_0 : i32, i32
  }
  func.func @transform_2(%arg0: i32) -> (i32, i32) {
    %c0_i32 = arith.constant 0 : i32
    %c0_i32_0 = arith.constant 0 : i32
    %c0_i32_1 = arith.constant 0 : i32
    return %c0_i32, %c0_i32_0 : i32, i32
  }
  func.func @transform_3(%arg0: i32) -> (i32, i32) {
    %c0_i32 = arith.constant 0 : i32
    %c0_i32_0 = arith.constant 0 : i32
    %c0_i32_1 = arith.constant 0 : i32
    return %c0_i32, %c0_i32_0 : i32, i32
  }
  func.func @transform_4(%arg0: i32) -> (i32, i32) {
    %c0_i32 = arith.constant 0 : i32
    %c0_i32_0 = arith.constant 0 : i32
    %c0_i32_1 = arith.constant 0 : i32
    return %c0_i32, %c0_i32_0 : i32, i32
  }
  func.func @transform_5(%arg0: i32) -> (i32, i32) {
    %c0_i32 = arith.constant 0 : i32
    %c0_i32_0 = arith.constant 0 : i32
    return %c0_i32, %arg0 : i32, i32
  }
}

</mosaic_0001>

<llo_original>
// kernel: _lambda_.4
$region0: #{_lambda_.4}
  #allocation0 [shape = 'u32[]', space=smem, size = 0x4, offset = 0x4, fixed_abs, tag = 'smem constant byte address 0x4 - core index']
  #allocation1 [shape = 'u32[72,128]{1,0:T(1,128)}', space=vmem, size = 0x9000, scoped, tag = 'internal scratch']
  %s0 = inlined_call_operand.vmem [shape: f32[32,4], index: 0, kind: input, shape index: {}]
  %s1 = inlined_call_operand.vmem [shape: f32[2,4,256], index: 1, kind: input, shape index: {}]
  %s2 = inlined_call_operand.vmem [shape: f32[32,1], index: 2, kind: input, shape index: {}]
  %s3 = inlined_call_operand.vmem [shape: f32[32,512], index: 3, kind: output, shape index: {}]
  %s4 = sld [smem:[#allocation0]]
  $region64: #{_lambda_.4} parent=0
    _
  %s6 = ssub.s32 1, %s4
  %s7 = scalar_select 0, %s6, %s4
  $region1: #{_lambda_.4} parent=0
    #allocation2 [shape = 'u8[65536]{0}', space=vmem, size = 0x10000, scoped, tag = 'output window, operand 0']
    loop: start=0, step=1, limit=4
    $region2: #{_lambda_.4} parent=1 // loop_pre_header
      _
    $region3: #{_lambda_.4} parent=1 // loop_header
      %s9 = sphi 0, %s13
      %p10 = scmp.ge.s32.totalorder %s9, 4
      %s16 = sphi 0, %s28
      %s17 = sphi 0, %s24
      %s18 = sphi 0, %s16
      %s19 = sphi 0, %s17
      %s20 = sphi 0, %s18
      %s21 = sphi 0, %s19
      %s29 = sphi 0, %s29
      %s31 = sphi 0, %s29
      %s32 = sphi 0, %s31
      %s46 = sphi 0, %s32
      %s54 = sphi 0, %s56
      %s57 = sphi 0, %s54
      %s58 = sphi 0, %s57
      %s74 = sphi 0, %s58
      %s78 = sphi 0, %s78
      %s80 = sphi 0, %s78
      %s81 = sphi 0, %s80
      %s95 = sphi 0, %s81
      %s103 = sphi 0, %s105
      %s106 = sphi 0, %s103
      %s107 = sphi 0, %s106
      %s123 = sphi 0, %s107
    $region4: #{_lambda_.4} parent=1 // loop_header_branch
      %12 = sbr.rel (%p10) target = $region8
    $region5: #{_lambda_.4} parent=1 // loop_body
      %s14 = ssub.s32 %s9, 1
      %s15 = ssub.s32 %s9, 2
      %s22 = sadd.s32 1, %s17
      %p23 = scmp.ge.s32.totalorder %s22, 1
      %s24 = scalar_select %p23, 0, %s22
      %s25 = sadd.s32 1, %s16
      %s26 = scalar_select %p23, %s25, %s16
      %p27 = scmp.ge.s32.totalorder %s26, 2
      %s28 = scalar_select %p27, 0, %s26
      %s30 = sadd.s32 %s29, 1
      %p33 = scmp.eq.s32.totalorder %s9, 1
      %p34 = scmp.ne.s32.totalorder %s29, %s31
      %p35 = scmp.eq.s32.totalorder %s9, 0
      %p36 = por %p34, %p35
      %p37 = scmp.ne.s32.totalorder %s29, %s31
      %p38 = scmp.eq.s32.totalorder %s14, 1
      %p39 = por %p37, %p38
      %p40 = scmp.ne.s32.totalorder %s31, %s32
      %p41 = scmp.eq.s32.totalorder %s14, 0
      %p42 = por %p40, %p41
      %p43 = scmp.ne.s32.totalorder %s31, %s32
      %p44 = scmp.eq.s32.totalorder %s15, 1
      %p45 = por %p43, %p44
      %p47 = scmp.ne.s32.totalorder %s32, %s46
      %p48 = scmp.eq.s32.totalorder %s15, 0
      %p49 = por %p47, %p48
      %s50 = ssub.s32 %s16, %s28
      %s51 = ssub.s32 %s17, %s24
      %s52 = sor.u32 %s50, %s51
      %p53 = scmp.eq.s32.totalorder %s52, 0
      %s55 = sadd.s32 %s54, 1
      %s56 = scalar_select %p53, %s54, %s55
      %p59 = pneg %p53
      %p60 = scmp.eq.s32.totalorder %s9, 1
      %p61 = por %p59, %p60
      %p62 = scmp.ne.s32.totalorder %s54, %s57
      %p63 = scmp.eq.s32.totalorder %s9, 0
      %p64 = por %p62, %p63
      %p65 = scmp.ne.s32.totalorder %s54, %s57
      %p66 = scmp.eq.s32.totalorder %s14, 1
      %p67 = por %p65, %p66
      %p68 = scmp.ne.s32.totalorder %s57, %s58
      %p69 = scmp.eq.s32.totalorder %s14, 0
      %p70 = por %p68, %p69
      %p71 = scmp.ne.s32.totalorder %s57, %s58
      %p72 = scmp.eq.s32.totalorder %s15, 1
      %p73 = por %p71, %p72
      %p75 = scmp.ne.s32.totalorder %s58, %s74
      %p76 = scmp.eq.s32.totalorder %s15, 0
      %p77 = por %p75, %p76
      %s79 = sadd.s32 %s78, 1
      %p82 = scmp.eq.s32.totalorder %s9, 1
      %p83 = scmp.ne.s32.totalorder %s78, %s80
      %p84 = scmp.eq.s32.totalorder %s9, 0
      %p85 = por %p83, %p84
      %p86 = scmp.ne.s32.totalorder %s78, %s80
      %p87 = scmp.eq.s32.totalorder %s14, 1
      %p88 = por %p86, %p87
      %p89 = scmp.ne.s32.totalorder %s80, %s81
      %p90 = scmp.eq.s32.totalorder %s14, 0
      %p91 = por %p89, %p90
      %p92 = scmp.ne.s32.totalorder %s80, %s81
      %p93 = scmp.eq.s32.totalorder %s15, 1
      %p94 = por %p92, %p93
      %p96 = scmp.ne.s32.totalorder %s81, %s95
      %p97 = scmp.eq.s32.totalorder %s15, 0
      %p98 = por %p96, %p97
      %s99 = sadd.s32 %s16, %s17
      %s100 = sadd.s32 %s28, %s24
      %s101 = ssub.s32 %s99, %s100
      %p102 = scmp.eq.s32.totalorder %s101, 0
      %s104 = sadd.s32 %s103, 1
      %s105 = scalar_select %p102, %s103, %s104
      %p108 = pneg %p102
      %p109 = scmp.eq.s32.totalorder %s9, 1
      %p110 = por %p108, %p109
      %p111 = scmp.ne.s32.totalorder %s103, %s106
      %p112 = scmp.eq.s32.totalorder %s9, 0
      %p113 = por %p111, %p112
      %p114 = scmp.ne.s32.totalorder %s103, %s106
      %p115 = scmp.eq.s32.totalorder %s14, 1
      %p116 = por %p114, %p115
      %p117 = scmp.ne.s32.totalorder %s106, %s107
      %p118 = scmp.eq.s32.totalorder %s14, 0
      %p119 = por %p117, %p118
      %p120 = scmp.ne.s32.totalorder %s106, %s107
      %p121 = scmp.eq.s32.totalorder %s15, 1
      %p122 = por %p120, %p121
      %p124 = scmp.ne.s32.totalorder %s107, %s123
      %p125 = scmp.eq.s32.totalorder %s15, 0
      %p126 = por %p124, %p125
      %p127 = scmp.le.s32.totalorder 1, %s9
      %p128 = scmp.lt.s32.totalorder %s9, 3
      %p129 = pnand %p127, %p128
      %p130 = pneg %p129
      // Predicated region
      $region9: #{_lambda_.4} parent=5 // pred_check
        _
      $region10: #{_lambda_.4} parent=5 // pred_check_branch
        %132 = sbr.rel (%p129) target = $region12
      $region11: #{_lambda_.4} parent=5 // pred_region
        %s133 = ssub.s32 %s9, 1
        // Predicated region
        $region13: #{_lambda_.4} parent=11 // pred_check
          %p134 = pneg %p42
        $region14: #{_lambda_.4} parent=11 // pred_check_branch
          %136 = sbr.rel (%p134) target = $region16
        $region15: #{_lambda_.4} parent=11 // pred_region
          _
        $region16: #{_lambda_.4} parent=11 // pred_fallthru
          _
        // Predicated region
        $region17: #{_lambda_.4} parent=11 // pred_check
          %p137 = pneg %p91
        $region18: #{_lambda_.4} parent=11 // pred_check_branch
          %139 = sbr.rel (%p137) target = $region20
        $region19: #{_lambda_.4} parent=11 // pred_region
          _
        $region20: #{_lambda_.4} parent=11 // pred_fallthru
          _
      $region12: #{_lambda_.4} parent=5 // pred_fallthru
        _
      %p140 = scmp.lt.s32.totalorder %s9, 2
      // Predicated region
      $region21: #{_lambda_.4} parent=5 // pred_check
        %p141 = pneg %p140
      $region22: #{_lambda_.4} parent=5 // pred_check_branch
        %143 = sbr.rel (%p141) target = $region24
      $region23: #{_lambda_.4} parent=5 // pred_region
        // Predicated region
        $region25: #{_lambda_.4} parent=23 // pred_check
          %p144 = pneg %p64
        $region26: #{_lambda_.4} parent=23 // pred_check_branch
          %146 = sbr.rel (%p144) target = $region28
        $region27: #{_lambda_.4} parent=23 // pred_region
          %s147 = smul.u32 2, %s17
          %p148 = scmp.lt.s32.totalorder %s16, 1
          %s149 = scalar_select %p148, %s16, 1
          %p150 = scmp.lt.s32.totalorder %s147, 1
          %s151 = scalar_select %p150, %s147, 1
          %s152 = smul.addr %s149, 2
          %s153 = sadd.s32 %s151, %s152
          %s154 = smul.addr %s153, 4
          %s155 = scalar_lea.vmem %s1, %s154
          %s156 = smul.u32 2, %s17
        $region28: #{_lambda_.4} parent=23 // pred_fallthru
          _
      $region24: #{_lambda_.4} parent=5 // pred_fallthru
        _
      %p157 = scmp.le.s32.totalorder 1, %s9
      %p158 = scmp.lt.s32.totalorder %s9, 3
      %p159 = pnand %p157, %p158
      %p160 = pneg %p159
      // Predicated region
      $region29: #{_lambda_.4} parent=5 // pred_check
        _
      $region30: #{_lambda_.4} parent=5 // pred_check_branch
        %162 = sbr.rel (%p159) target = $region32
      $region31: #{_lambda_.4} parent=5 // pred_region
        %s163 = ssub.s32 %s9, 1
        %p164 = pneg %p42
        %p165 = pneg %p39
        %s166 = smul.u32 2, %s19
        %p167 = scmp.lt.s32.totalorder %s18, 1
        %s168 = scalar_select %p167, %s18, 1
        %p169 = scmp.lt.s32.totalorder %s166, 1
        %s170 = scalar_select %p169, %s166, 1
        %s171 = smul.addr %s168, 2
        %s172 = sadd.s32 %s170, %s171
        %s173 = smul.addr %s172, 4
        %s174 = scalar_lea.vmem %s1, %s173
        %p175 = pneg %p70
        %p176 = pneg %p67
        %p177 = pneg %p91
        %p178 = pneg %p88
        %p179 = pneg %p119
        %p180 = pneg %p116
        %s181 = sand.u32 %s106, 1
        %s182 = sand.u32 %s106, 1
        %s183 = smul.addr %s182, 64
        %s184 = scalar_lea.vmem [#allocation2], %s183
        %s185 = smul.u32 2, %s19
        %p186 = scmp.lt.s32.totalorder %s18, 1
        %s187 = scalar_select %p186, %s18, 1
        %p188 = scmp.lt.s32.totalorder %s185, 1
        %s189 = scalar_select %p188, %s185, 1
        %s190 = smul.addr %s187, 2
        %s191 = sadd.s32 %s189, %s190
        %s192 = smul.addr %s191, 4
        %s193 = scalar_lea.vmem %s1, %s192
        %s194 = smul.u32 2, %s19
        %s195 = sadd.s32 %s18, %s19
        %s196 = smul.u32 2, %s195
        %v197 = vld [vmem:[%s0] sm:$0xff]
        %v198 = vld [vmem:[%s0 + $0x8] sm:$0xff]
        %v199 = vld [vmem:[%s0 + $0x10] sm:$0xff]
        %v200 = vld [vmem:[%s0 + $0x18] sm:$0xff]
        %v201 = vld [vmem:[%s193] sm:$0xff]
        %v202 = vld [vmem:[%s2] sm:$0xff]
        %v203 = vld [vmem:[%s2 + $0x8] sm:$0xff]
        %v204 = vld [vmem:[%s2 + $0x10] sm:$0xff]
        %v205 = vld [vmem:[%s2 + $0x18] sm:$0xff]
        %207 = vset.pattern.permute.xlu0 0
        %208 = vperm.xlu0 %207, %v202
        %v209 = vpop.permute.xlu0 %208
        %212 = vset.pattern.permute.xlu0 0
        %213 = vperm.xlu0 %212, %v203
        %v214 = vpop.permute.xlu0 %213
        %217 = vset.pattern.permute.xlu0 0
        %218 = vperm.xlu0 %217, %v204
        %v219 = vpop.permute.xlu0 %218
        %222 = vset.pattern.permute.xlu0 0
        %223 = vperm.xlu0 %222, %v205
        %v224 = vpop.permute.xlu0 %223
        %227 = vst [vmem:[#allocation1] ss:$2 sm:$0xff] %v201
        %v228 = vld.sshfl [vmem:[#allocation1] sm:$0xff pattern:$0x75316420]
        %v229 = vld.sshfl [vmem:[#allocation1 + $0x8] sm:$0xff pattern:$0x75316420]
        %vm230 = vcmask 31744
        %v232 = vsel %vm230, %v197, 0
        %v235 = vsel %vm230, %v198, 0
        %v238 = vsel %vm230, %v199, 0
        %v241 = vsel %vm230, %v200, 0
        %vm243 = vcmask 1043456
        %v244 = vsel %vm243, %v228, 0
        %v246 = vsel %vm243, %v229, 0
        %248 = vmatpush.msra.mxu0 0.0
        %249 = vmatpush.msra.mxu0 0.0
        %250 = vmatpush.msra.mxu0 0.0
        %251 = vmatpush.msra.mxu0 0.0
        %252 = vmatpush.msra.mxu0 0.0
        %253 = vmatpush.msra.mxu0 0.0
        %254 = vmatpush.msra.mxu0 0.0
        %255 = vmatpush.msra.mxu0 0.0
        %256 = vmatpush.msra.mxu0 0.0
        %257 = vmatpush.msra.mxu0 0.0
        %258 = vmatpush.msra.mxu0 0.0
        %259 = vmatpush.msra.mxu0 0.0
        %260 = vmatpush.msra.mxu0 0.0
        %261 = vmatpush.msra.mxu0 0.0
        %262 = vmatpush.msra.mxu0 0.0
        %263 = vmatpush.msra.mxu0 %v244
        %264 = vmatmul.f32.gmra.mxu0 %v232
        %v265 = vpop.f32.mrf.mxu0
        %v266 = vadd.f32 %v209, %v265
        %267 = vmatmul.f32.gmra.mxu0 %v235
        %v268 = vpop.f32.mrf.mxu0
        %v269 = vadd.f32 %v214, %v268
        %270 = vmatmul.f32.gmra.mxu0 %v238
        %v271 = vpop.f32.mrf.mxu0
        %v272 = vadd.f32 %v219, %v271
        %273 = vmatmul.f32.gmra.mxu0 %v241
        %v274 = vpop.f32.mrf.mxu0
        %v275 = vadd.f32 %v224, %v274
        %276 = vdwg.mxu0
        %277 = vmatpush.msra.mxu0 0.0
        %278 = vmatpush.msra.mxu0 0.0
        %279 = vmatpush.msra.mxu0 0.0
        %280 = vmatpush.msra.mxu0 0.0
        %281 = vmatpush.msra.mxu0 0.0
        %282 = vmatpush.msra.mxu0 0.0
        %283 = vmatpush.msra.mxu0 0.0
        %284 = vmatpush.msra.mxu0 0.0
        %285 = vmatpush.msra.mxu0 0.0
        %286 = vmatpush.msra.mxu0 0.0
        %287 = vmatpush.msra.mxu0 0.0
        %288 = vmatpush.msra.mxu0 0.0
        %289 = vmatpush.msra.mxu0 0.0
        %290 = vmatpush.msra.mxu0 0.0
        %291 = vmatpush.msra.mxu0 0.0
        %292 = vmatpush.msra.mxu0 %v246
        %293 = vmatmul.f32.gmra.mxu0 %v232
        %v294 = vpop.f32.mrf.mxu0
        %v295 = vadd.f32 %v209, %v294
        %296 = vmatmul.f32.gmra.mxu0 %v235
        %v297 = vpop.f32.mrf.mxu0
        %v298 = vadd.f32 %v214, %v297
        %299 = vmatmul.f32.gmra.mxu0 %v238
        %v300 = vpop.f32.mrf.mxu0
        %v301 = vadd.f32 %v219, %v300
        %302 = vmatmul.f32.gmra.mxu0 %v241
        %v303 = vpop.f32.mrf.mxu0
        %v304 = vadd.f32 %v224, %v303
        %305 = vdwg.mxu0
        %306 = vst [vmem:[%s184] sm:$0xff] %v266
        %307 = vst [vmem:[%s184 + $0x8] sm:$0xff] %v295
        %308 = vst [vmem:[%s184 + $0x10] sm:$0xff] %v269
        %309 = vst [vmem:[%s184 + $0x18] sm:$0xff] %v298
        %310 = vst [vmem:[%s184 + $0x20] sm:$0xff] %v272
        %311 = vst [vmem:[%s184 + $0x28] sm:$0xff] %v301
        %312 = vst [vmem:[%s184 + $0x30] sm:$0xff] %v275
        %313 = vst [vmem:[%s184 + $0x38] sm:$0xff] %v304
        %s314 = sand.u32 %s106, 1
        %s315 = sand.u32 %s106, 1
        %s316 = smul.addr %s315, 64
        %s317 = scalar_lea.vmem [#allocation2], %s316
        // Predicated region
        $region33: #{_lambda_.4} parent=31 // pred_check
          %p318 = pneg %p116
        $region34: #{_lambda_.4} parent=31 // pred_check_branch
          %320 = sbr.rel (%p318) target = $region36
        $region35: #{_lambda_.4} parent=31 // pred_region
          %s321 = sadd.s32 %s18, %s19
          %s322 = smul.u32 2, %s321
          %s323 = smul.addr %s322, 8
          %s324 = scalar_lea.vmem %s3, %s323
          // Predicated region
          $region37: #{_lambda_.4} parent=35 // pred_check
            _
          $region38: #{_lambda_.4} parent=35 // pred_check_branch
            %326 = sbr.rel (0) target = $region40
          $region39: #{_lambda_.4} parent=35 // pred_region
            // Predicated region
            $region41: #{_lambda_.4} parent=39 // pred_check
              _
            $region42: #{_lambda_.4} parent=39 // pred_check_branch
              %328 = sbr.rel (0) target = $region44
            $region43: #{_lambda_.4} parent=39 // pred_region
              loop: start=0, step=1, limit=1
              $region45: #{_lambda_.4} parent=43 // loop_pre_header
                _
              $region46: #{_lambda_.4} parent=43 // loop_header
                %s330 = sphi 0, %s334
                %p331 = scmp.ge.s32.totalorder %s330, 1
                %s335 = sphi %s317, %s317
                %s336 = sphi %s324, %s324
              $region47: #{_lambda_.4} parent=43 // loop_header_branch
                %333 = sbr.rel (%p331) target = $region51
              $region48: #{_lambda_.4} parent=43 // loop_body
                %v337 = vld [vmem:[%s335] sm:$0xff]
                %338 = vst [vmem:[%s336] sm:$0xff] %v337
                %v339 = vld [vmem:[%s335 + $0x8] sm:$0xff]
                %340 = vst [vmem:[%s336 + $0x8] sm:$0xff] %v339
                %v341 = vld [vmem:[%s335 + $0x10] sm:$0xff]
                %342 = vst [vmem:[%s336 + $0x20] sm:$0xff] %v341
                %v343 = vld [vmem:[%s335 + $0x18] sm:$0xff]
                %344 = vst [vmem:[%s336 + $0x28] sm:$0xff] %v343
                %v345 = vld [vmem:[%s335 + $0x20] sm:$0xff]
                %346 = vst [vmem:[%s336 + $0x40] sm:$0xff] %v345
                %v347 = vld [vmem:[%s335 + $0x28] sm:$0xff]
                %348 = vst [vmem:[%s336 + $0x48] sm:$0xff] %v347
                %v349 = vld [vmem:[%s335 + $0x30] sm:$0xff]
                %350 = vst [vmem:[%s336 + $0x60] sm:$0xff] %v349
                %v351 = vld [vmem:[%s335 + $0x38] sm:$0xff]
                %352 = vst [vmem:[%s336 + $0x68] sm:$0xff] %v351
              $region49: #{_lambda_.4} parent=43 // loop_footer
                %s334 = sadd.s32 1, %s330
              $region50: #{_lambda_.4} parent=43 // loop_footer_branch
                %329 = sbr.rel target = $region46
              $region51: #{_lambda_.4} parent=43 // loop_exit
                _
            $region44: #{_lambda_.4} parent=39 // pred_fallthru
              _
            // Predicated region
            $region52: #{_lambda_.4} parent=39 // pred_check
              _
            $region53: #{_lambda_.4} parent=39 // pred_check_branch
              %354 = sbr.rel target = $region55
            $region54: #{_lambda_.4} parent=39 // pred_region
              _
            $region55: #{_lambda_.4} parent=39 // pred_fallthru
              _
          $region40: #{_lambda_.4} parent=35 // pred_fallthru
            _
          %355 = vnop
        $region36: #{_lambda_.4} parent=31 // pred_fallthru
          _
      $region32: #{_lambda_.4} parent=5 // pred_fallthru
        _
      %p356 = scmp.le.s32.totalorder 2, %s9
      // Predicated region
      $region56: #{_lambda_.4} parent=5 // pred_check
        %p357 = pneg %p356
      $region57: #{_lambda_.4} parent=5 // pred_check_branch
        %359 = sbr.rel (%p357) target = $region59
      $region58: #{_lambda_.4} parent=5 // pred_region
        %s360 = ssub.s32 %s9, 2
        // Predicated region
        $region60: #{_lambda_.4} parent=58 // pred_check
          %p361 = pneg %p122
        $region61: #{_lambda_.4} parent=58 // pred_check_branch
          %363 = sbr.rel (%p361) target = $region63
        $region62: #{_lambda_.4} parent=58 // pred_region
          %s364 = sand.u32 %s107, 1
          %s365 = sand.u32 %s107, 1
          %s366 = smul.addr %s365, 64
          %s367 = scalar_lea.vmem [#allocation2], %s366
        $region63: #{_lambda_.4} parent=58 // pred_fallthru
          _
      $region59: #{_lambda_.4} parent=5 // pred_fallthru
        _
    $region6: #{_lambda_.4} parent=1 // loop_footer
      %s13 = sadd.s32 1, %s9
    $region7: #{_lambda_.4} parent=1 // loop_footer_branch
      %8 = sbr.rel target = $region3
    $region8: #{_lambda_.4} parent=1 // loop_exit
      _

// kernel: reverse.4
$region0: #{reverse.4}
  #allocation0 [shape = 's32[1]{0}', space=sflag, size = 0x4, scoped, tag = 'scoped memory for reverse.4']
  %s0 = inlined_call_operand.vmem [shape: f32[32,2,16,7], index: 0, kind: input, shape index: {}]
  %s1 = inlined_call_operand.vmem [shape: f32[32,2,16,7], index: 1, kind: output, shape index: {}]
  %s2 = scalar_lea.vmem %s0, 96
  %v3 = vld [vmem:[%s2] sm:$0xff]
  %4 = vst [vmem:[%s1] sm:$0xff] %v3
  %s5 = scalar_lea.vmem %s0, 208
  %v6 = vld [vmem:[%s5] sm:$0xff]
  %s7 = scalar_lea.vmem %s1, 112
  %8 = vst [vmem:[%s7] sm:$0xff] %v6
  %s9 = scalar_lea.vmem %s0, 80
  %v10 = vld [vmem:[%s9] sm:$0xff]
  %s11 = scalar_lea.vmem %s1, 16
  %12 = vst [vmem:[%s11] sm:$0xff] %v10
  %s13 = scalar_lea.vmem %s0, 192
  %v14 = vld [vmem:[%s13] sm:$0xff]
  %s15 = scalar_lea.vmem %s1, 128
  %16 = vst [vmem:[%s15] sm:$0xff] %v14
  %s17 = scalar_lea.vmem %s0, 64
  %v18 = vld [vmem:[%s17] sm:$0xff]
  %s19 = scalar_lea.vmem %s1, 32
  %20 = vst [vmem:[%s19] sm:$0xff] %v18
  %s21 = scalar_lea.vmem %s0, 176
  %v22 = vld [vmem:[%s21] sm:$0xff]
  %s23 = scalar_lea.vmem %s1, 144
  %24 = vst [vmem:[%s23] sm:$0xff] %v22
  %s25 = scalar_lea.vmem %s0, 48
  %v26 = vld [vmem:[%s25] sm:$0xff]
  %s27 = scalar_lea.vmem %s1, 48
  %28 = vst [vmem:[%s27] sm:$0xff] %v26
  %s29 = scalar_lea.vmem %s0, 160
  %v30 = vld [vmem:[%s29] sm:$0xff]
  %s31 = scalar_lea.vmem %s1, 160
  %32 = vst [vmem:[%s31] sm:$0xff] %v30
  %s33 = scalar_lea.vmem %s0, 32
  %v34 = vld [vmem:[%s33] sm:$0xff]
  %s35 = scalar_lea.vmem %s1, 64
  %36 = vst [vmem:[%s35] sm:$0xff] %v34
  %s37 = scalar_lea.vmem %s0, 144
  %v38 = vld [vmem:[%s37] sm:$0xff]
  %s39 = scalar_lea.vmem %s1, 176
  %40 = vst [vmem:[%s39] sm:$0xff] %v38
  %s41 = scalar_lea.vmem %s0, 16
  %v42 = vld [vmem:[%s41] sm:$0xff]
  %s43 = scalar_lea.vmem %s1, 80
  %44 = vst [vmem:[%s43] sm:$0xff] %v42
  %s45 = scalar_lea.vmem %s0, 128
  %v46 = vld [vmem:[%s45] sm:$0xff]
  %s47 = scalar_lea.vmem %s1, 192
  %48 = vst [vmem:[%s47] sm:$0xff] %v46
  %v49 = vld [vmem:[%s0] sm:$0xff]
  %s50 = scalar_lea.vmem %s1, 96
  %51 = vst [vmem:[%s50] sm:$0xff] %v49
  %s52 = scalar_lea.vmem %s0, 112
  %v53 = vld [vmem:[%s52] sm:$0xff]
  %s54 = scalar_lea.vmem %s1, 208
  %55 = vst [vmem:[%s54] sm:$0xff] %v53
  %s56 = scalar_lea.vmem %s0, 104
  %v57 = vld [vmem:[%s56] sm:$0xff]
  %s58 = scalar_lea.vmem %s1, 8
  %59 = vst [vmem:[%s58] sm:$0xff] %v57
  %s60 = scalar_lea.vmem %s0, 216
  %v61 = vld [vmem:[%s60] sm:$0xff]
  %s62 = scalar_lea.vmem %s1, 120
  %63 = vst [vmem:[%s62] sm:$0xff] %v61
  %s64 = scalar_lea.vmem %s0, 88
  %v65 = vld [vmem:[%s64] sm:$0xff]
  %s66 = scalar_lea.vmem %s1, 24
  %67 = vst [vmem:[%s66] sm:$0xff] %v65
  %s68 = scalar_lea.vmem %s0, 200
  %v69 = vld [vmem:[%s68] sm:$0xff]
  %s70 = scalar_lea.vmem %s1, 136
  %71 = vst [vmem:[%s70] sm:$0xff] %v69
  %s72 = scalar_lea.vmem %s0, 72
  %v73 = vld [vmem:[%s72] sm:$0xff]
  %s74 = scalar_lea.vmem %s1, 40
  %75 = vst [vmem:[%s74] sm:$0xff] %v73
  %s76 = scalar_lea.vmem %s0, 184
  %v77 = vld [vmem:[%s76] sm:$0xff]
  %s78 = scalar_lea.vmem %s1, 152
  %79 = vst [vmem:[%s78] sm:$0xff] %v77
  %s80 = scalar_lea.vmem %s0, 56
  %v81 = vld [vmem:[%s80] sm:$0xff]
  %s82 = scalar_lea.vmem %s1, 56
  %83 = vst [vmem:[%s82] sm:$0xff] %v81
  %s84 = scalar_lea.vmem %s0, 168
  %v85 = vld [vmem:[%s84] sm:$0xff]
  %s86 = scalar_lea.vmem %s1, 168
  %87 = vst [vmem:[%s86] sm:$0xff] %v85
  %s88 = scalar_lea.vmem %s0, 40
  %v89 = vld [vmem:[%s88] sm:$0xff]
  %s90 = scalar_lea.vmem %s1, 72
  %91 = vst [vmem:[%s90] sm:$0xff] %v89
  %s92 = scalar_lea.vmem %s0, 152
  %v93 = vld [vmem:[%s92] sm:$0xff]
  %s94 = scalar_lea.vmem %s1, 184
  %95 = vst [vmem:[%s94] sm:$0xff] %v93
  %s96 = scalar_lea.vmem %s0, 24
  %v97 = vld [vmem:[%s96] sm:$0xff]
  %s98 = scalar_lea.vmem %s1, 88
  %99 = vst [vmem:[%s98] sm:$0xff] %v97
  %s100 = scalar_lea.vmem %s0, 136
  %v101 = vld [vmem:[%s100] sm:$0xff]
  %s102 = scalar_lea.vmem %s1, 200
  %103 = vst [vmem:[%s102] sm:$0xff] %v101
  %s104 = scalar_lea.vmem %s0, 8
  %v105 = vld [vmem:[%s104] sm:$0xff]
  %s106 = scalar_lea.vmem %s1, 104
  %107 = vst [vmem:[%s106] sm:$0xff] %v105
  %s108 = scalar_lea.vmem %s0, 120
  %v109 = vld [vmem:[%s108] sm:$0xff]
  %s110 = scalar_lea.vmem %s1, 216
  %111 = vst [vmem:[%s110] sm:$0xff] %v109

// kernel: _lambda_.5
$region0: #{_lambda_.5}
  #allocation0 [shape = 'u32[]', space=smem, size = 0x4, offset = 0x4, fixed_abs, tag = 'smem constant byte address 0x4 - core index']
  #allocation1 [shape = 'u32[72,128]{1,0:T(1,128)}', space=vmem, size = 0x9000, scoped, tag = 'internal scratch']
  %s0 = inlined_call_operand.vmem [shape: f32[32,512], index: 0, kind: input, shape index: {}]
  %s1 = inlined_call_operand.vmem [shape: f32[32,512], index: 1, kind: input, shape index: {}]
  %s2 = inlined_call_operand.vmem [shape: f32[32,32], index: 2, kind: input, shape index: {}]
  %s3 = inlined_call_operand.vmem [shape: f32[32,1], index: 3, kind: input, shape index: {}]
  %s4 = inlined_call_operand.vmem [shape: f32[32,512], index: 4, kind: output, shape index: {}]
  %s5 = sld [smem:[#allocation0]]
  $region114: #{_lambda_.5} parent=0
    _
  %s7 = ssub.s32 1, %s5
  %s8 = scalar_select 0, %s7, %s5
  $region1: #{_lambda_.5} parent=0
    #allocation2 [shape = 'u8[65536]{0}', space=vmem, size = 0x10000, scoped, tag = 'input window, operand 0']
    #allocation3 [shape = 'u8[65536]{0}', space=vmem, size = 0x10000, scoped, tag = 'input window, operand 1']
    #allocation4 [shape = 'u8[65536]{0}', space=vmem, size = 0x10000, scoped, tag = 'output window, operand 0']
    loop: start=0, step=1, limit=4
    $region2: #{_lambda_.5} parent=1 // loop_pre_header
      _
    $region3: #{_lambda_.5} parent=1 // loop_header
      %s10 = sphi 0, %s14
      %p11 = scmp.ge.s32.totalorder %s10, 4
      %s20 = sphi 0, %s22
      %s23 = sphi 0, %s20
      %s24 = sphi 0, %s23
      %s40 = sphi 0, %s24
      %s46 = sphi 0, %s48
      %s49 = sphi 0, %s46
      %s50 = sphi 0, %s49
      %s66 = sphi 0, %s50
      %s70 = sphi 0, %s70
      %s72 = sphi 0, %s70
      %s73 = sphi 0, %s72
      %s87 = sphi 0, %s73
      %s91 = sphi 0, %s91
      %s93 = sphi 0, %s91
      %s94 = sphi 0, %s93
      %s108 = sphi 0, %s94
      %s114 = sphi 0, %s116
      %s117 = sphi 0, %s114
      %s118 = sphi 0, %s117
      %s134 = sphi 0, %s118
    $region4: #{_lambda_.5} parent=1 // loop_header_branch
      %13 = sbr.rel (%p11) target = $region8
    $region5: #{_lambda_.5} parent=1 // loop_body
      %s15 = ssub.s32 %s10, 1
      %s16 = ssub.s32 %s10, 2
      %s17 = sadd.s32 %s10, 1
      %s18 = ssub.s32 %s10, %s17
      %p19 = scmp.eq.s32.totalorder %s18, 0
      %s21 = sadd.s32 %s20, 1
      %s22 = scalar_select %p19, %s20, %s21
      %p25 = pneg %p19
      %p26 = scmp.eq.s32.totalorder %s10, 1
      %p27 = por %p25, %p26
      %p28 = scmp.ne.s32.totalorder %s20, %s23
      %p29 = scmp.eq.s32.totalorder %s10, 0
      %p30 = por %p28, %p29
      %p31 = scmp.ne.s32.totalorder %s20, %s23
      %p32 = scmp.eq.s32.totalorder %s15, 1
      %p33 = por %p31, %p32
      %p34 = scmp.ne.s32.totalorder %s23, %s24
      %p35 = scmp.eq.s32.totalorder %s15, 0
      %p36 = por %p34, %p35
      %p37 = scmp.ne.s32.totalorder %s23, %s24
      %p38 = scmp.eq.s32.totalorder %s16, 1
      %p39 = por %p37, %p38
      %p41 = scmp.ne.s32.totalorder %s24, %s40
      %p42 = scmp.eq.s32.totalorder %s16, 0
      %p43 = por %p41, %p42
      %s44 = ssub.s32 %s10, %s17
      %p45 = scmp.eq.s32.totalorder %s44, 0
      %s47 = sadd.s32 %s46, 1
      %s48 = scalar_select %p45, %s46, %s47
      %p51 = pneg %p45
      %p52 = scmp.eq.s32.totalorder %s10, 1
      %p53 = por %p51, %p52
      %p54 = scmp.ne.s32.totalorder %s46, %s49
      %p55 = scmp.eq.s32.totalorder %s10, 0
      %p56 = por %p54, %p55
      %p57 = scmp.ne.s32.totalorder %s46, %s49
      %p58 = scmp.eq.s32.totalorder %s15, 1
      %p59 = por %p57, %p58
      %p60 = scmp.ne.s32.totalorder %s49, %s50
      %p61 = scmp.eq.s32.totalorder %s15, 0
      %p62 = por %p60, %p61
      %p63 = scmp.ne.s32.totalorder %s49, %s50
      %p64 = scmp.eq.s32.totalorder %s16, 1
      %p65 = por %p63, %p64
      %p67 = scmp.ne.s32.totalorder %s50, %s66
      %p68 = scmp.eq.s32.totalorder %s16, 0
      %p69 = por %p67, %p68
      %s71 = sadd.s32 %s70, 1
      %p74 = scmp.eq.s32.totalorder %s10, 1
      %p75 = scmp.ne.s32.totalorder %s70, %s72
      %p76 = scmp.eq.s32.totalorder %s10, 0
      %p77 = por %p75, %p76
      %p78 = scmp.ne.s32.totalorder %s70, %s72
      %p79 = scmp.eq.s32.totalorder %s15, 1
      %p80 = por %p78, %p79
      %p81 = scmp.ne.s32.totalorder %s72, %s73
      %p82 = scmp.eq.s32.totalorder %s15, 0
      %p83 = por %p81, %p82
      %p84 = scmp.ne.s32.totalorder %s72, %s73
      %p85 = scmp.eq.s32.totalorder %s16, 1
      %p86 = por %p84, %p85
      %p88 = scmp.ne.s32.totalorder %s73, %s87
      %p89 = scmp.eq.s32.totalorder %s16, 0
      %p90 = por %p88, %p89
      %s92 = sadd.s32 %s91, 1
      %p95 = scmp.eq.s32.totalorder %s10, 1
      %p96 = scmp.ne.s32.totalorder %s91, %s93
      %p97 = scmp.eq.s32.totalorder %s10, 0
      %p98 = por %p96, %p97
      %p99 = scmp.ne.s32.totalorder %s91, %s93
      %p100 = scmp.eq.s32.totalorder %s15, 1
      %p101 = por %p99, %p100
      %p102 = scmp.ne.s32.totalorder %s93, %s94
      %p103 = scmp.eq.s32.totalorder %s15, 0
      %p104 = por %p102, %p103
      %p105 = scmp.ne.s32.totalorder %s93, %s94
      %p106 = scmp.eq.s32.totalorder %s16, 1
      %p107 = por %p105, %p106
      %p109 = scmp.ne.s32.totalorder %s94, %s108
      %p110 = scmp.eq.s32.totalorder %s16, 0
      %p111 = por %p109, %p110
      %s112 = ssub.s32 %s10, %s17
      %p113 = scmp.eq.s32.totalorder %s112, 0
      %s115 = sadd.s32 %s114, 1
      %s116 = scalar_select %p113, %s114, %s115
      %p119 = pneg %p113
      %p120 = scmp.eq.s32.totalorder %s10, 1
      %p121 = por %p119, %p120
      %p122 = scmp.ne.s32.totalorder %s114, %s117
      %p123 = scmp.eq.s32.totalorder %s10, 0
      %p124 = por %p122, %p123
      %p125 = scmp.ne.s32.totalorder %s114, %s117
      %p126 = scmp.eq.s32.totalorder %s15, 1
      %p127 = por %p125, %p126
      %p128 = scmp.ne.s32.totalorder %s117, %s118
      %p129 = scmp.eq.s32.totalorder %s15, 0
      %p130 = por %p128, %p129
      %p131 = scmp.ne.s32.totalorder %s117, %s118
      %p132 = scmp.eq.s32.totalorder %s16, 1
      %p133 = por %p131, %p132
      %p135 = scmp.ne.s32.totalorder %s118, %s134
      %p136 = scmp.eq.s32.totalorder %s16, 0
      %p137 = por %p135, %p136
      %p138 = scmp.le.s32.totalorder 1, %s10
      %p139 = scmp.lt.s32.totalorder %s10, 3
      %p140 = pnand %p138, %p139
      %p141 = pneg %p140
      // Predicated region
      $region9: #{_lambda_.5} parent=5 // pred_check
        _
      $region10: #{_lambda_.5} parent=5 // pred_check_branch
        %143 = sbr.rel (%p140) target = $region12
      $region11: #{_lambda_.5} parent=5 // pred_region
        %s144 = ssub.s32 %s10, 1
        // Predicated region
        $region13: #{_lambda_.5} parent=11 // pred_check
          %p145 = pneg %p83
        $region14: #{_lambda_.5} parent=11 // pred_check_branch
          %147 = sbr.rel (%p145) target = $region16
        $region15: #{_lambda_.5} parent=11 // pred_region
          _
        $region16: #{_lambda_.5} parent=11 // pred_fallthru
          _
        // Predicated region
        $region17: #{_lambda_.5} parent=11 // pred_check
          %p148 = pneg %p104
        $region18: #{_lambda_.5} parent=11 // pred_check_branch
          %150 = sbr.rel (%p148) target = $region20
        $region19: #{_lambda_.5} parent=11 // pred_region
          _
        $region20: #{_lambda_.5} parent=11 // pred_fallthru
          _
      $region12: #{_lambda_.5} parent=5 // pred_fallthru
        _
      %p151 = scmp.lt.s32.totalorder %s10, 2
      // Predicated region
      $region21: #{_lambda_.5} parent=5 // pred_check
        %p152 = pneg %p151
      $region22: #{_lambda_.5} parent=5 // pred_check_branch
        %154 = sbr.rel (%p152) target = $region24
      $region23: #{_lambda_.5} parent=5 // pred_region
        // Predicated region
        $region25: #{_lambda_.5} parent=23 // pred_check
          %p155 = pneg %p30
        $region26: #{_lambda_.5} parent=23 // pred_check_branch
          %157 = sbr.rel (%p155) target = $region28
        $region27: #{_lambda_.5} parent=23 // pred_region
          %s158 = sand.u32 %s20, 1
          %s159 = sand.u32 %s20, 1
          %s160 = smul.addr %s159, 64
          %s161 = scalar_lea.vmem [#allocation2], %s160
          %s162 = smul.u32 2, %s10
          %s163 = smul.addr %s162, 8
          %s164 = scalar_lea.vmem %s0, %s163
          // Predicated region
          $region29: #{_lambda_.5} parent=27 // pred_check
            _
          $region30: #{_lambda_.5} parent=27 // pred_check_branch
            %166 = sbr.rel (0) target = $region32
          $region31: #{_lambda_.5} parent=27 // pred_region
            // Predicated region
            $region33: #{_lambda_.5} parent=31 // pred_check
              _
            $region34: #{_lambda_.5} parent=31 // pred_check_branch
              %168 = sbr.rel (0) target = $region36
            $region35: #{_lambda_.5} parent=31 // pred_region
              loop: start=0, step=1, limit=1
              $region37: #{_lambda_.5} parent=35 // loop_pre_header
                _
              $region38: #{_lambda_.5} parent=35 // loop_header
                %s170 = sphi 0, %s174
                %p171 = scmp.ge.s32.totalorder %s170, 1
                %s175 = sphi %s164, %s164
                %s176 = sphi %s161, %s161
              $region39: #{_lambda_.5} parent=35 // loop_header_branch
                %173 = sbr.rel (%p171) target = $region43
              $region40: #{_lambda_.5} parent=35 // loop_body
                %v177 = vld [vmem:[%s175] sm:$0xff]
                %178 = vst [vmem:[%s176] sm:$0xff] %v177
                %v179 = vld [vmem:[%s175 + $0x8] sm:$0xff]
                %180 = vst [vmem:[%s176 + $0x8] sm:$0xff] %v179
                %v181 = vld [vmem:[%s175 + $0x20] sm:$0xff]
                %182 = vst [vmem:[%s176 + $0x10] sm:$0xff] %v181
                %v183 = vld [vmem:[%s175 + $0x28] sm:$0xff]
                %184 = vst [vmem:[%s176 + $0x18] sm:$0xff] %v183
                %v185 = vld [vmem:[%s175 + $0x40] sm:$0xff]
                %186 = vst [vmem:[%s176 + $0x20] sm:$0xff] %v185
                %v187 = vld [vmem:[%s175 + $0x48] sm:$0xff]
                %188 = vst [vmem:[%s176 + $0x28] sm:$0xff] %v187
                %v189 = vld [vmem:[%s175 + $0x60] sm:$0xff]
                %190 = vst [vmem:[%s176 + $0x30] sm:$0xff] %v189
                %v191 = vld [vmem:[%s175 + $0x68] sm:$0xff]
                %192 = vst [vmem:[%s176 + $0x38] sm:$0xff] %v191
              $region41: #{_lambda_.5} parent=35 // loop_footer
                %s174 = sadd.s32 1, %s170
              $region42: #{_lambda_.5} parent=35 // loop_footer_branch
                %169 = sbr.rel target = $region38
              $region43: #{_lambda_.5} parent=35 // loop_exit
                _
            $region36: #{_lambda_.5} parent=31 // pred_fallthru
              _
            // Predicated region
            $region44: #{_lambda_.5} parent=31 // pred_check
              _
            $region45: #{_lambda_.5} parent=31 // pred_check_branch
              %194 = sbr.rel target = $region47
            $region46: #{_lambda_.5} parent=31 // pred_region
              _
            $region47: #{_lambda_.5} parent=31 // pred_fallthru
              _
          $region32: #{_lambda_.5} parent=27 // pred_fallthru
            _
          %195 = vnop
        $region28: #{_lambda_.5} parent=23 // pred_fallthru
          _
        // Predicated region
        $region48: #{_lambda_.5} parent=23 // pred_check
          %p196 = pneg %p56
        $region49: #{_lambda_.5} parent=23 // pred_check_branch
          %198 = sbr.rel (%p196) target = $region51
        $region50: #{_lambda_.5} parent=23 // pred_region
          %s199 = sand.u32 %s46, 1
          %s200 = sand.u32 %s46, 1
          %s201 = smul.addr %s200, 64
          %s202 = scalar_lea.vmem [#allocation3], %s201
          %s203 = smul.u32 2, %s10
          %s204 = smul.addr %s203, 8
          %s205 = scalar_lea.vmem %s1, %s204
          // Predicated region
          $region52: #{_lambda_.5} parent=50 // pred_check
            _
          $region53: #{_lambda_.5} parent=50 // pred_check_branch
            %207 = sbr.rel (0) target = $region55
          $region54: #{_lambda_.5} parent=50 // pred_region
            // Predicated region
            $region56: #{_lambda_.5} parent=54 // pred_check
              _
            $region57: #{_lambda_.5} parent=54 // pred_check_branch
              %209 = sbr.rel (0) target = $region59
            $region58: #{_lambda_.5} parent=54 // pred_region
              loop: start=0, step=1, limit=1
              $region60: #{_lambda_.5} parent=58 // loop_pre_header
                _
              $region61: #{_lambda_.5} parent=58 // loop_header
                %s211 = sphi 0, %s215
                %p212 = scmp.ge.s32.totalorder %s211, 1
                %s216 = sphi %s205, %s205
                %s217 = sphi %s202, %s202
              $region62: #{_lambda_.5} parent=58 // loop_header_branch
                %214 = sbr.rel (%p212) target = $region66
              $region63: #{_lambda_.5} parent=58 // loop_body
                %v218 = vld [vmem:[%s216] sm:$0xff]
                %219 = vst [vmem:[%s217] sm:$0xff] %v218
                %v220 = vld [vmem:[%s216 + $0x8] sm:$0xff]
                %221 = vst [vmem:[%s217 + $0x8] sm:$0xff] %v220
                %v222 = vld [vmem:[%s216 + $0x20] sm:$0xff]
                %223 = vst [vmem:[%s217 + $0x10] sm:$0xff] %v222
                %v224 = vld [vmem:[%s216 + $0x28] sm:$0xff]
                %225 = vst [vmem:[%s217 + $0x18] sm:$0xff] %v224
                %v226 = vld [vmem:[%s216 + $0x40] sm:$0xff]
                %227 = vst [vmem:[%s217 + $0x20] sm:$0xff] %v226
                %v228 = vld [vmem:[%s216 + $0x48] sm:$0xff]
                %229 = vst [vmem:[%s217 + $0x28] sm:$0xff] %v228
                %v230 = vld [vmem:[%s216 + $0x60] sm:$0xff]
                %231 = vst [vmem:[%s217 + $0x30] sm:$0xff] %v230
                %v232 = vld [vmem:[%s216 + $0x68] sm:$0xff]
                %233 = vst [vmem:[%s217 + $0x38] sm:$0xff] %v232
              $region64: #{_lambda_.5} parent=58 // loop_footer
                %s215 = sadd.s32 1, %s211
              $region65: #{_lambda_.5} parent=58 // loop_footer_branch
                %210 = sbr.rel target = $region61
              $region66: #{_lambda_.5} parent=58 // loop_exit
                _
            $region59: #{_lambda_.5} parent=54 // pred_fallthru
              _
            // Predicated region
            $region67: #{_lambda_.5} parent=54 // pred_check
              _
            $region68: #{_lambda_.5} parent=54 // pred_check_branch
              %235 = sbr.rel target = $region70
            $region69: #{_lambda_.5} parent=54 // pred_region
              _
            $region70: #{_lambda_.5} parent=54 // pred_fallthru
              _
          $region55: #{_lambda_.5} parent=50 // pred_fallthru
            _
          %236 = vnop
        $region51: #{_lambda_.5} parent=23 // pred_fallthru
          _
      $region24: #{_lambda_.5} parent=5 // pred_fallthru
        _
      %p237 = scmp.le.s32.totalorder 1, %s10
      %p238 = scmp.lt.s32.totalorder %s10, 3
      %p239 = pnand %p237, %p238
      %p240 = pneg %p239
      // Predicated region
      $region71: #{_lambda_.5} parent=5 // pred_check
        _
      $region72: #{_lambda_.5} parent=5 // pred_check_branch
        %242 = sbr.rel (%p239) target = $region74
      $region73: #{_lambda_.5} parent=5 // pred_region
        %s243 = ssub.s32 %s10, 1
        %s244 = sand.u32 %s23, 1
        %s245 = sand.u32 %s23, 1
        %s246 = smul.addr %s245, 64
        %s247 = scalar_lea.vmem [#allocation2], %s246
        // Predicated region
        $region75: #{_lambda_.5} parent=73 // pred_check
          %p248 = pneg %p36
        $region76: #{_lambda_.5} parent=73 // pred_check_branch
          %250 = sbr.rel (%p248) target = $region78
        $region77: #{_lambda_.5} parent=73 // pred_region
          _
        $region78: #{_lambda_.5} parent=73 // pred_fallthru
          _
        %s251 = sand.u32 %s49, 1
        %s252 = sand.u32 %s49, 1
        %s253 = smul.addr %s252, 64
        %s254 = scalar_lea.vmem [#allocation3], %s253
        // Predicated region
        $region79: #{_lambda_.5} parent=73 // pred_check
          %p255 = pneg %p62
        $region80: #{_lambda_.5} parent=73 // pred_check_branch
          %257 = sbr.rel (%p255) target = $region82
        $region81: #{_lambda_.5} parent=73 // pred_region
          _
        $region82: #{_lambda_.5} parent=73 // pred_fallthru
          _
        %s258 = sand.u32 %s23, 1
        %s259 = sand.u32 %s23, 1
        %s260 = smul.addr %s259, 64
        %s261 = scalar_lea.vmem [#allocation2], %s260
        %p262 = pneg %p36
        %p263 = pneg %p33
        %s264 = sand.u32 %s49, 1
        %s265 = sand.u32 %s49, 1
        %s266 = smul.addr %s265, 64
        %s267 = scalar_lea.vmem [#allocation3], %s266
        %p268 = pneg %p62
        %p269 = pneg %p59
        %p270 = pneg %p83
        %p271 = pneg %p80
        %p272 = pneg %p104
        %p273 = pneg %p101
        %p274 = pneg %p130
        %p275 = pneg %p127
        %s276 = sand.u32 %s117, 1
        %s277 = sand.u32 %s117, 1
        %s278 = smul.addr %s277, 64
        %s279 = scalar_lea.vmem [#allocation4], %s278
        %s280 = smul.u32 2, %s15
        %s281 = smul.u32 2, %s15
        %s282 = smul.u32 2, %s15
        %v283 = vld [vmem:[%s247] sm:$0xff]
        %v284 = vld [vmem:[%s247 + $0x8] sm:$0xff]
        %v285 = vld [vmem:[%s247 + $0x10] sm:$0xff]
        %v286 = vld [vmem:[%s247 + $0x18] sm:$0xff]
        %v287 = vld [vmem:[%s247 + $0x20] sm:$0xff]
        %v288 = vld [vmem:[%s247 + $0x28] sm:$0xff]
        %v289 = vld [vmem:[%s247 + $0x30] sm:$0xff]
        %v290 = vld [vmem:[%s247 + $0x38] sm:$0xff]
        %v291 = vld [vmem:[%s2] sm:$0xff]
        %v292 = vld [vmem:[%s2 + $0x8] sm:$0xff]
        %v293 = vld [vmem:[%s2 + $0x10] sm:$0xff]
        %v294 = vld [vmem:[%s2 + $0x18] sm:$0xff]
        %v295 = vld [vmem:[%s3] sm:$0xff]
        %v296 = vld [vmem:[%s3 + $0x8] sm:$0xff]
        %v297 = vld [vmem:[%s3 + $0x10] sm:$0xff]
        %v298 = vld [vmem:[%s3 + $0x18] sm:$0xff]
        %300 = vset.pattern.permute.xlu0 0
        %301 = vperm.xlu0 %300, %v295
        %v302 = vpop.permute.xlu0 %301
        %305 = vset.pattern.permute.xlu0 0
        %306 = vperm.xlu0 %305, %v296
        %v307 = vpop.permute.xlu0 %306
        %310 = vset.pattern.permute.xlu0 0
        %311 = vperm.xlu0 %310, %v297
        %v312 = vpop.permute.xlu0 %311
        %315 = vset.pattern.permute.xlu0 0
        %316 = vperm.xlu0 %315, %v298
        %v317 = vpop.permute.xlu0 %316
        %vm319 = vcmask 261120
        %v321 = vsel %vm319, %v291, 0
        %v324 = vsel %vm319, %v292, 0
        %v327 = vsel %vm319, %v293, 0
        %v330 = vsel %vm319, %v294, 0
        %332 = vmatpush.msra.mxu0 0.0
        %333 = vmatpush.msra.mxu0 0.0
        %334 = vmatpush.msra.mxu0 0.0
        %335 = vmatpush.msra.mxu0 0.0
        %336 = vmatpush.msra.mxu0 0.0
        %337 = vmatpush.msra.mxu0 0.0
        %338 = vmatpush.msra.mxu0 0.0
        %339 = vmatpush.msra.mxu0 0.0
        %340 = vmatpush.msra.mxu0 0.0
        %341 = vmatpush.msra.mxu0 0.0
        %342 = vmatpush.msra.mxu0 0.0
        %343 = vmatpush.msra.mxu0 0.0
        %344 = vmatpush.msra.mxu0 %v289
        %345 = vmatpush.msra.mxu0 %v287
        %346 = vmatpush.msra.mxu0 %v285
        %347 = vmatpush.msra.mxu0 %v283
        %348 = vmatmul.f32.gmra.mxu0 %v321
        %v349 = vpop.f32.mrf.mxu0
        %v350 = vadd.f32 %v302, %v349
        %351 = vmatmul.f32.gmra.mxu0 %v324
        %v352 = vpop.f32.mrf.mxu0
        %v353 = vadd.f32 %v307, %v352
        %354 = vmatmul.f32.gmra.mxu0 %v327
        %v355 = vpop.f32.mrf.mxu0
        %v356 = vadd.f32 %v312, %v355
        %357 = vmatmul.f32.gmra.mxu0 %v330
        %v358 = vpop.f32.mrf.mxu0
        %v359 = vadd.f32 %v317, %v358
        %360 = vdwg.mxu0
        %361 = vmatpush.msra.mxu0 0.0
        %362 = vmatpush.msra.mxu0 0.0
        %363 = vmatpush.msra.mxu0 0.0
        %364 = vmatpush.msra.mxu0 0.0
        %365 = vmatpush.msra.mxu0 0.0
        %366 = vmatpush.msra.mxu0 0.0
        %367 = vmatpush.msra.mxu0 0.0
        %368 = vmatpush.msra.mxu0 0.0
        %369 = vmatpush.msra.mxu0 0.0
        %370 = vmatpush.msra.mxu0 0.0
        %371 = vmatpush.msra.mxu0 0.0
        %372 = vmatpush.msra.mxu0 0.0
        %373 = vmatpush.msra.mxu0 %v290
        %374 = vmatpush.msra.mxu0 %v288
        %375 = vmatpush.msra.mxu0 %v286
        %376 = vmatpush.msra.mxu0 %v284
        %377 = vmatmul.f32.gmra.mxu0 %v321
        %v378 = vpop.f32.mrf.mxu0
        %v379 = vadd.f32 %v302, %v378
        %380 = vmatmul.f32.gmra.mxu0 %v324
        %v381 = vpop.f32.mrf.mxu0
        %v382 = vadd.f32 %v307, %v381
        %383 = vmatmul.f32.gmra.mxu0 %v327
        %v384 = vpop.f32.mrf.mxu0
        %v385 = vadd.f32 %v312, %v384
        %386 = vmatmul.f32.gmra.mxu0 %v330
        %v387 = vpop.f32.mrf.mxu0
        %v388 = vadd.f32 %v317, %v387
        %389 = vdwg.mxu0
        %v390 = vld [vmem:[%s254] sm:$0xff]
        %v391 = vld [vmem:[%s254 + $0x8] sm:$0xff]
        %v392 = vld [vmem:[%s254 + $0x10] sm:$0xff]
        %v393 = vld [vmem:[%s254 + $0x18] sm:$0xff]
        %v394 = vld [vmem:[%s254 + $0x20] sm:$0xff]
        %v395 = vld [vmem:[%s254 + $0x28] sm:$0xff]
        %v396 = vld [vmem:[%s254 + $0x30] sm:$0xff]
        %v397 = vld [vmem:[%s254 + $0x38] sm:$0xff]
        %v398 = vadd.f32 %v350, %v390
        %v399 = vadd.f32 %v379, %v391
        %v400 = vadd.f32 %v353, %v392
        %v401 = vadd.f32 %v382, %v393
        %v402 = vadd.f32 %v356, %v394
        %v403 = vadd.f32 %v385, %v395
        %v404 = vadd.f32 %v359, %v396
        %v405 = vadd.f32 %v388, %v397
        %v406 = vmul.f32 %v398, 0.5
        %v407 = vmul.f32 %v399, 0.5
        %v408 = vmul.f32 %v400, 0.5
        %v409 = vmul.f32 %v401, 0.5
        %v410 = vmul.f32 %v402, 0.5
        %v411 = vmul.f32 %v403, 0.5
        %v412 = vmul.f32 %v404, 0.5
        %v413 = vmul.f32 %v405, 0.5
        %v414 = vmul.f32 %v398, 0.70710677
        %v415 = vmul.f32 %v399, 0.70710677
        %v416 = vmul.f32 %v400, 0.70710677
        %v417 = vmul.f32 %v401, 0.70710677
        %v418 = vmul.f32 %v402, 0.70710677
        %v419 = vmul.f32 %v403, 0.70710677
        %v420 = vmul.f32 %v404, 0.70710677
        %v421 = vmul.f32 %v405, 0.70710677
        %v422 = vand.u32 2147483647, %v414
        %v423 = vand.u32 2147483647, %v415
        %v424 = vand.u32 2147483647, %v416
        %v425 = vand.u32 2147483647, %v417
        %v426 = vand.u32 2147483647, %v418
        %v427 = vand.u32 2147483647, %v419
        %v428 = vand.u32 2147483647, %v420
        %v429 = vand.u32 2147483647, %v421
        %v430 = vmul.f32 %v422, 0.3275911
        %v431 = vmul.f32 %v423, 0.3275911
        %v432 = vmul.f32 %v424, 0.3275911
        %v433 = vmul.f32 %v425, 0.3275911
        %v434 = vmul.f32 %v426, 0.3275911
        %v435 = vmul.f32 %v427, 0.3275911
        %v436 = vmul.f32 %v428, 0.3275911
        %v437 = vmul.f32 %v429, 0.3275911
        %v438 = vadd.f32 %v430, 1.0
        %v439 = vadd.f32 %v431, 1.0
        %v440 = vadd.f32 %v432, 1.0
        %v441 = vadd.f32 %v433, 1.0
        %v442 = vadd.f32 %v434, 1.0
        %v443 = vadd.f32 %v435, 1.0
        %v444 = vadd.f32 %v436, 1.0
        %v445 = vadd.f32 %v437, 1.0
        %v446 = vrcp.pop %v438
        %v447 = vrcp.pop %v439
        %v448 = vrcp.pop %v440
        %v449 = vrcp.pop %v441
        %v450 = vrcp.pop %v442
        %v451 = vrcp.pop %v443
        %v452 = vrcp.pop %v444
        %v453 = vrcp.pop %v445
        %v454 = vmul.f32 %v446, 1.0614054
        %v455 = vmul.f32 %v447, 1.0614054
        %v456 = vmul.f32 %v448, 1.0614054
        %v457 = vmul.f32 %v449, 1.0614054
        %v458 = vmul.f32 %v450, 1.0614054
        %v459 = vmul.f32 %v451, 1.0614054
        %v460 = vmul.f32 %v452, 1.0614054
        %v461 = vmul.f32 %v453, 1.0614054
        %v462 = vadd.f32 %v454, -1.4531521
        %v463 = vadd.f32 %v455, -1.4531521
        %v464 = vadd.f32 %v456, -1.4531521
        %v465 = vadd.f32 %v457, -1.4531521
        %v466 = vadd.f32 %v458, -1.4531521
        %v467 = vadd.f32 %v459, -1.4531521
        %v468 = vadd.f32 %v460, -1.4531521
        %v469 = vadd.f32 %v461, -1.4531521
        %v470 = vmul.f32 %v446, %v462
        %v471 = vmul.f32 %v447, %v463
        %v472 = vmul.f32 %v448, %v464
        %v473 = vmul.f32 %v449, %v465
        %v474 = vmul.f32 %v450, %v466
        %v475 = vmul.f32 %v451, %v467
        %v476 = vmul.f32 %v452, %v468
        %v477 = vmul.f32 %v453, %v469
        %v478 = vadd.f32 %v470, 1.4214138
        %v479 = vadd.f32 %v471, 1.4214138
        %v480 = vadd.f32 %v472, 1.4214138
        %v481 = vadd.f32 %v473, 1.4214138
        %v482 = vadd.f32 %v474, 1.4214138
        %v483 = vadd.f32 %v475, 1.4214138
        %v484 = vadd.f32 %v476, 1.4214138
        %v485 = vadd.f32 %v477, 1.4214138
        %v486 = vmul.f32 %v446, %v478
        %v487 = vmul.f32 %v447, %v479
        %v488 = vmul.f32 %v448, %v480
        %v489 = vmul.f32 %v449, %v481
        %v490 = vmul.f32 %v450, %v482
        %v491 = vmul.f32 %v451, %v483
        %v492 = vmul.f32 %v452, %v484
        %v493 = vmul.f32 %v453, %v485
        %v494 = vadd.f32 %v486, -0.28449672
        %v495 = vadd.f32 %v487, -0.28449672
        %v496 = vadd.f32 %v488, -0.28449672
        %v497 = vadd.f32 %v489, -0.28449672
        %v498 = vadd.f32 %v490, -0.28449672
        %v499 = vadd.f32 %v491, -0.28449672
        %v500 = vadd.f32 %v492, -0.28449672
        %v501 = vadd.f32 %v493, -0.28449672
        %v502 = vmul.f32 %v446, %v494
        %v503 = vmul.f32 %v447, %v495
        %v504 = vmul.f32 %v448, %v496
        %v505 = vmul.f32 %v449, %v497
        %v506 = vmul.f32 %v450, %v498
        %v507 = vmul.f32 %v451, %v499
        %v508 = vmul.f32 %v452, %v500
        %v509 = vmul.f32 %v453, %v501
        %v510 = vadd.f32 %v502, 0.2548296
        %v511 = vadd.f32 %v503, 0.2548296
        %v512 = vadd.f32 %v504, 0.2548296
        %v513 = vadd.f32 %v505, 0.2548296
        %v514 = vadd.f32 %v506, 0.2548296
        %v515 = vadd.f32 %v507, 0.2548296
        %v516 = vadd.f32 %v508, 0.2548296
        %v517 = vadd.f32 %v509, 0.2548296
        %v518 = vmul.f32 %v446, %v510
        %v519 = vmul.f32 %v447, %v511
        %v520 = vmul.f32 %v448, %v512
        %v521 = vmul.f32 %v449, %v513
        %v522 = vmul.f32 %v450, %v514
        %v523 = vmul.f32 %v451, %v515
        %v524 = vmul.f32 %v452, %v516
        %v525 = vmul.f32 %v453, %v517
        %v526 = vsub.f32 0.0, %v422
        %v527 = vsub.f32 0.0, %v423
        %v528 = vsub.f32 0.0, %v424
        %v529 = vsub.f32 0.0, %v425
        %v530 = vsub.f32 0.0, %v426
        %v531 = vsub.f32 0.0, %v427
        %v532 = vsub.f32 0.0, %v428
        %v533 = vsub.f32 0.0, %v429
        %v534 = vmul.f32 %v526, %v422
        %v535 = vmul.f32 %v527, %v423
        %v536 = vmul.f32 %v528, %v424
        %v537 = vmul.f32 %v529, %v425
        %v538 = vmul.f32 %v530, %v426
        %v539 = vmul.f32 %v531, %v427
        %v540 = vmul.f32 %v532, %v428
        %v541 = vmul.f32 %v533, %v429
        %v542 = vmul.f32 %v534, 1.442695
        %v543 = vpow.pop %v542
        %v544 = vmul.f32 %v535, 1.442695
        %v545 = vpow.pop %v544
        %v546 = vmul.f32 %v536, 1.442695
        %v547 = vpow.pop %v546
        %v548 = vmul.f32 %v537, 1.442695
        %v549 = vpow.pop %v548
        %v550 = vmul.f32 %v538, 1.442695
        %v551 = vpow.pop %v550
        %v552 = vmul.f32 %v539, 1.442695
        %v553 = vpow.pop %v552
        %v554 = vmul.f32 %v540, 1.442695
        %v555 = vpow.pop %v554
        %v556 = vmul.f32 %v541, 1.442695
        %v557 = vpow.pop %v556
        %v558 = vmul.f32 %v518, %v543
        %v559 = vmul.f32 %v519, %v545
        %v560 = vmul.f32 %v520, %v547
        %v561 = vmul.f32 %v521, %v549
        %v562 = vmul.f32 %v522, %v551
        %v563 = vmul.f32 %v523, %v553
        %v564 = vmul.f32 %v524, %v555
        %v565 = vmul.f32 %v525, %v557
        %v566 = vsub.f32 1.0, %v558
        %v567 = vsub.f32 1.0, %v559
        %v568 = vsub.f32 1.0, %v560
        %v569 = vsub.f32 1.0, %v561
        %v570 = vsub.f32 1.0, %v562
        %v571 = vsub.f32 1.0, %v563
        %v572 = vsub.f32 1.0, %v564
        %v573 = vsub.f32 1.0, %v565
        %vm574 = vcmp.ge.f32.partialorder %v414, 0.0
        %vm575 = vcmp.ge.f32.partialorder %v415, 0.0
        %vm576 = vcmp.ge.f32.partialorder %v416, 0.0
        %vm577 = vcmp.ge.f32.partialorder %v417, 0.0
        %vm578 = vcmp.ge.f32.partialorder %v418, 0.0
        %vm579 = vcmp.ge.f32.partialorder %v419, 0.0
        %vm580 = vcmp.ge.f32.partialorder %v420, 0.0
        %vm581 = vcmp.ge.f32.partialorder %v421, 0.0
        %v582 = vsub.f32 0.0, %v566
        %v583 = vsub.f32 0.0, %v567
        %v584 = vsub.f32 0.0, %v568
        %v585 = vsub.f32 0.0, %v569
        %v586 = vsub.f32 0.0, %v570
        %v587 = vsub.f32 0.0, %v571
        %v588 = vsub.f32 0.0, %v572
        %v589 = vsub.f32 0.0, %v573
        %v590 = vsel %vm574, %v566, %v582
        %v591 = vsel %vm575, %v567, %v583
        %v592 = vsel %vm576, %v568, %v584
        %v593 = vsel %vm577, %v569, %v585
        %v594 = vsel %vm578, %v570, %v586
        %v595 = vsel %vm579, %v571, %v587
        %v596 = vsel %vm580, %v572, %v588
        %v597 = vsel %vm581, %v573, %v589
        %v598 = vadd.f32 %v590, 1.0
        %v599 = vadd.f32 %v591, 1.0
        %v600 = vadd.f32 %v592, 1.0
        %v601 = vadd.f32 %v593, 1.0
        %v602 = vadd.f32 %v594, 1.0
        %v603 = vadd.f32 %v595, 1.0
        %v604 = vadd.f32 %v596, 1.0
        %v605 = vadd.f32 %v597, 1.0
        %v606 = vmul.f32 %v406, %v598
        %v607 = vmul.f32 %v407, %v599
        %v608 = vmul.f32 %v408, %v600
        %v609 = vmul.f32 %v409, %v601
        %v610 = vmul.f32 %v410, %v602
        %v611 = vmul.f32 %v411, %v603
        %v612 = vmul.f32 %v412, %v604
        %v613 = vmul.f32 %v413, %v605
        %v614 = vadd.f32 %v606, %v283
        %v615 = vadd.f32 %v607, %v284
        %v616 = vadd.f32 %v608, %v285
        %v617 = vadd.f32 %v609, %v286
        %v618 = vadd.f32 %v610, %v287
        %v619 = vadd.f32 %v611, %v288
        %v620 = vadd.f32 %v612, %v289
        %v621 = vadd.f32 %v613, %v290
        %622 = vst [vmem:[%s279] sm:$0xff] %v614
        %623 = vst [vmem:[%s279 + $0x8] sm:$0xff] %v615
        %624 = vst [vmem:[%s279 + $0x10] sm:$0xff] %v616
        %625 = vst [vmem:[%s279 + $0x18] sm:$0xff] %v617
        %626 = vst [vmem:[%s279 + $0x20] sm:$0xff] %v618
        %627 = vst [vmem:[%s279 + $0x28] sm:$0xff] %v619
        %628 = vst [vmem:[%s279 + $0x30] sm:$0xff] %v620
        %629 = vst [vmem:[%s279 + $0x38] sm:$0xff] %v621
        %s630 = sand.u32 %s117, 1
        %s631 = sand.u32 %s117, 1
        %s632 = smul.addr %s631, 64
        %s633 = scalar_lea.vmem [#allocation4], %s632
        // Predicated region
        $region83: #{_lambda_.5} parent=73 // pred_check
          %p634 = pneg %p127
        $region84: #{_lambda_.5} parent=73 // pred_check_branch
          %636 = sbr.rel (%p634) target = $region86
        $region85: #{_lambda_.5} parent=73 // pred_region
          %s637 = smul.u32 2, %s15
          %s638 = smul.addr %s637, 8
          %s639 = scalar_lea.vmem %s4, %s638
          // Predicated region
          $region87: #{_lambda_.5} parent=85 // pred_check
            _
          $region88: #{_lambda_.5} parent=85 // pred_check_branch
            %641 = sbr.rel (0) target = $region90
          $region89: #{_lambda_.5} parent=85 // pred_region
            // Predicated region
            $region91: #{_lambda_.5} parent=89 // pred_check
              _
            $region92: #{_lambda_.5} parent=89 // pred_check_branch
              %643 = sbr.rel (0) target = $region94
            $region93: #{_lambda_.5} parent=89 // pred_region
              loop: start=0, step=1, limit=1
              $region95: #{_lambda_.5} parent=93 // loop_pre_header
                _
              $region96: #{_lambda_.5} parent=93 // loop_header
                %s645 = sphi 0, %s649
                %p646 = scmp.ge.s32.totalorder %s645, 1
                %s650 = sphi %s633, %s633
                %s651 = sphi %s639, %s639
              $region97: #{_lambda_.5} parent=93 // loop_header_branch
                %648 = sbr.rel (%p646) target = $region101
              $region98: #{_lambda_.5} parent=93 // loop_body
                %v652 = vld [vmem:[%s650] sm:$0xff]
                %653 = vst [vmem:[%s651] sm:$0xff] %v652
                %v654 = vld [vmem:[%s650 + $0x8] sm:$0xff]
                %655 = vst [vmem:[%s651 + $0x8] sm:$0xff] %v654
                %v656 = vld [vmem:[%s650 + $0x10] sm:$0xff]
                %657 = vst [vmem:[%s651 + $0x20] sm:$0xff] %v656
                %v658 = vld [vmem:[%s650 + $0x18] sm:$0xff]
                %659 = vst [vmem:[%s651 + $0x28] sm:$0xff] %v658
                %v660 = vld [vmem:[%s650 + $0x20] sm:$0xff]
                %661 = vst [vmem:[%s651 + $0x40] sm:$0xff] %v660
                %v662 = vld [vmem:[%s650 + $0x28] sm:$0xff]
                %663 = vst [vmem:[%s651 + $0x48] sm:$0xff] %v662
                %v664 = vld [vmem:[%s650 + $0x30] sm:$0xff]
                %665 = vst [vmem:[%s651 + $0x60] sm:$0xff] %v664
                %v666 = vld [vmem:[%s650 + $0x38] sm:$0xff]
                %667 = vst [vmem:[%s651 + $0x68] sm:$0xff] %v666
              $region99: #{_lambda_.5} parent=93 // loop_footer
                %s649 = sadd.s32 1, %s645
              $region100: #{_lambda_.5} parent=93 // loop_footer_branch
                %644 = sbr.rel target = $region96
              $region101: #{_lambda_.5} parent=93 // loop_exit
                _
            $region94: #{_lambda_.5} parent=89 // pred_fallthru
              _
            // Predicated region
            $region102: #{_lambda_.5} parent=89 // pred_check
              _
            $region103: #{_lambda_.5} parent=89 // pred_check_branch
              %669 = sbr.rel target = $region105
            $region104: #{_lambda_.5} parent=89 // pred_region
              _
            $region105: #{_lambda_.5} parent=89 // pred_fallthru
              _
          $region90: #{_lambda_.5} parent=85 // pred_fallthru
            _
          %670 = vnop
        $region86: #{_lambda_.5} parent=73 // pred_fallthru
          _
      $region74: #{_lambda_.5} parent=5 // pred_fallthru
        _
      %p671 = scmp.le.s32.totalorder 2, %s10
      // Predicated region
      $region106: #{_lambda_.5} parent=5 // pred_check
        %p672 = pneg %p671
      $region107: #{_lambda_.5} parent=5 // pred_check_branch
        %674 = sbr.rel (%p672) target = $region109
      $region108: #{_lambda_.5} parent=5 // pred_region
        %s675 = ssub.s32 %s10, 2
        // Predicated region
        $region110: #{_lambda_.5} parent=108 // pred_check
          %p676 = pneg %p133
        $region111: #{_lambda_.5} parent=108 // pred_check_branch
          %678 = sbr.rel (%p676) target = $region113
        $region112: #{_lambda_.5} parent=108 // pred_region
          %s679 = sand.u32 %s118, 1
          %s680 = sand.u32 %s118, 1
          %s681 = smul.addr %s680, 64
          %s682 = scalar_lea.vmem [#allocation4], %s681
        $region113: #{_lambda_.5} parent=108 // pred_fallthru
          _
      $region109: #{_lambda_.5} parent=5 // pred_fallthru
        _
    $region6: #{_lambda_.5} parent=1 // loop_footer
      %s14 = sadd.s32 1, %s10
    $region7: #{_lambda_.5} parent=1 // loop_footer_branch
      %9 = sbr.rel target = $region3
    $region8: #{_lambda_.5} parent=1 // loop_exit
      _

// kernel: _lambda_.7
$region0: #{_lambda_.7}
  #allocation0 [shape = 'u32[]', space=smem, size = 0x4, offset = 0x4, fixed_abs, tag = 'smem constant byte address 0x4 - core index']
  #allocation1 [shape = 'u32[72,128]{1,0:T(1,128)}', space=vmem, size = 0x9000, scoped, tag = 'internal scratch']
  #allocation2 [shape = 'f32[1,1]{1,0:T(1,128)S(1)}', space=vmem, size = 0x200, scoped, tag = 'scoped memory for _lambda_.7']
  %s0 = inlined_call_operand.vmem [shape: f32[32,512], index: 0, kind: input, shape index: {}]
  %s1 = inlined_call_operand.vmem [shape: f32[64,32], index: 1, kind: input, shape index: {}]
  %s2 = inlined_call_operand.vmem [shape: f32[64,1], index: 2, kind: input, shape index: {}]
  %s3 = inlined_call_operand.vmem [shape: f32[1,64], index: 3, kind: input, shape index: {}]
  %s4 = inlined_call_operand.<no memory space> [shape: f32[1,1], index: 4, kind: input, shape index: {}]
  %s5 = inlined_call_operand.vmem [shape: f32[1,512], index: 5, kind: output, shape index: {}]
  %s6 = sld [smem:[#allocation0]]
  $region76: #{_lambda_.7} parent=0
    _
  %s8 = ssub.s32 1, %s6
  %s9 = scalar_select 0, %s8, %s6
  %v10 = vstv %s4
  %11 = vst [vmem:[#allocation2] sm:$0x1] %v10
  $region1: #{_lambda_.7} parent=0
    #allocation3 [shape = 'u8[65536]{0}', space=vmem, size = 0x10000, scoped, tag = 'input window, operand 0']
    loop: start=0, step=1, limit=4
    $region2: #{_lambda_.7} parent=1 // loop_pre_header
      _
    $region3: #{_lambda_.7} parent=1 // loop_header
      %s13 = sphi 0, %s17
      %p14 = scmp.ge.s32.totalorder %s13, 4
      %s23 = sphi 0, %s25
      %s26 = sphi 0, %s23
      %s27 = sphi 0, %s26
      %s43 = sphi 0, %s27
      %s47 = sphi 0, %s47
      %s49 = sphi 0, %s47
      %s50 = sphi 0, %s49
      %s64 = sphi 0, %s50
      %s68 = sphi 0, %s68
      %s70 = sphi 0, %s68
      %s71 = sphi 0, %s70
      %s85 = sphi 0, %s71
      %s89 = sphi 0, %s89
      %s91 = sphi 0, %s89
      %s92 = sphi 0, %s91
      %s106 = sphi 0, %s92
      %s110 = sphi 0, %s110
      %s112 = sphi 0, %s110
      %s113 = sphi 0, %s112
      %s127 = sphi 0, %s113
      %s133 = sphi 0, %s135
      %s136 = sphi 0, %s133
      %s137 = sphi 0, %s136
      %s153 = sphi 0, %s137
    $region4: #{_lambda_.7} parent=1 // loop_header_branch
      %16 = sbr.rel (%p14) target = $region8
    $region5: #{_lambda_.7} parent=1 // loop_body
      %s18 = ssub.s32 %s13, 1
      %s19 = ssub.s32 %s13, 2
      %s20 = sadd.s32 %s13, 1
      %s21 = ssub.s32 %s13, %s20
      %p22 = scmp.eq.s32.totalorder %s21, 0
      %s24 = sadd.s32 %s23, 1
      %s25 = scalar_select %p22, %s23, %s24
      %p28 = pneg %p22
      %p29 = scmp.eq.s32.totalorder %s13, 1
      %p30 = por %p28, %p29
      %p31 = scmp.ne.s32.totalorder %s23, %s26
      %p32 = scmp.eq.s32.totalorder %s13, 0
      %p33 = por %p31, %p32
      %p34 = scmp.ne.s32.totalorder %s23, %s26
      %p35 = scmp.eq.s32.totalorder %s18, 1
      %p36 = por %p34, %p35
      %p37 = scmp.ne.s32.totalorder %s26, %s27
      %p38 = scmp.eq.s32.totalorder %s18, 0
      %p39 = por %p37, %p38
      %p40 = scmp.ne.s32.totalorder %s26, %s27
      %p41 = scmp.eq.s32.totalorder %s19, 1
      %p42 = por %p40, %p41
      %p44 = scmp.ne.s32.totalorder %s27, %s43
      %p45 = scmp.eq.s32.totalorder %s19, 0
      %p46 = por %p44, %p45
      %s48 = sadd.s32 %s47, 1
      %p51 = scmp.eq.s32.totalorder %s13, 1
      %p52 = scmp.ne.s32.totalorder %s47, %s49
      %p53 = scmp.eq.s32.totalorder %s13, 0
      %p54 = por %p52, %p53
      %p55 = scmp.ne.s32.totalorder %s47, %s49
      %p56 = scmp.eq.s32.totalorder %s18, 1
      %p57 = por %p55, %p56
      %p58 = scmp.ne.s32.totalorder %s49, %s50
      %p59 = scmp.eq.s32.totalorder %s18, 0
      %p60 = por %p58, %p59
      %p61 = scmp.ne.s32.totalorder %s49, %s50
      %p62 = scmp.eq.s32.totalorder %s19, 1
      %p63 = por %p61, %p62
      %p65 = scmp.ne.s32.totalorder %s50, %s64
      %p66 = scmp.eq.s32.totalorder %s19, 0
      %p67 = por %p65, %p66
      %s69 = sadd.s32 %s68, 1
      %p72 = scmp.eq.s32.totalorder %s13, 1
      %p73 = scmp.ne.s32.totalorder %s68, %s70
      %p74 = scmp.eq.s32.totalorder %s13, 0
      %p75 = por %p73, %p74
      %p76 = scmp.ne.s32.totalorder %s68, %s70
      %p77 = scmp.eq.s32.totalorder %s18, 1
      %p78 = por %p76, %p77
      %p79 = scmp.ne.s32.totalorder %s70, %s71
      %p80 = scmp.eq.s32.totalorder %s18, 0
      %p81 = por %p79, %p80
      %p82 = scmp.ne.s32.totalorder %s70, %s71
      %p83 = scmp.eq.s32.totalorder %s19, 1
      %p84 = por %p82, %p83
      %p86 = scmp.ne.s32.totalorder %s71, %s85
      %p87 = scmp.eq.s32.totalorder %s19, 0
      %p88 = por %p86, %p87
      %s90 = sadd.s32 %s89, 1
      %p93 = scmp.eq.s32.totalorder %s13, 1
      %p94 = scmp.ne.s32.totalorder %s89, %s91
      %p95 = scmp.eq.s32.totalorder %s13, 0
      %p96 = por %p94, %p95
      %p97 = scmp.ne.s32.totalorder %s89, %s91
      %p98 = scmp.eq.s32.totalorder %s18, 1
      %p99 = por %p97, %p98
      %p100 = scmp.ne.s32.totalorder %s91, %s92
      %p101 = scmp.eq.s32.totalorder %s18, 0
      %p102 = por %p100, %p101
      %p103 = scmp.ne.s32.totalorder %s91, %s92
      %p104 = scmp.eq.s32.totalorder %s19, 1
      %p105 = por %p103, %p104
      %p107 = scmp.ne.s32.totalorder %s92, %s106
      %p108 = scmp.eq.s32.totalorder %s19, 0
      %p109 = por %p107, %p108
      %s111 = sadd.s32 %s110, 1
      %p114 = scmp.eq.s32.totalorder %s13, 1
      %p115 = scmp.ne.s32.totalorder %s110, %s112
      %p116 = scmp.eq.s32.totalorder %s13, 0
      %p117 = por %p115, %p116
      %p118 = scmp.ne.s32.totalorder %s110, %s112
      %p119 = scmp.eq.s32.totalorder %s18, 1
      %p120 = por %p118, %p119
      %p121 = scmp.ne.s32.totalorder %s112, %s113
      %p122 = scmp.eq.s32.totalorder %s18, 0
      %p123 = por %p121, %p122
      %p124 = scmp.ne.s32.totalorder %s112, %s113
      %p125 = scmp.eq.s32.totalorder %s19, 1
      %p126 = por %p124, %p125
      %p128 = scmp.ne.s32.totalorder %s113, %s127
      %p129 = scmp.eq.s32.totalorder %s19, 0
      %p130 = por %p128, %p129
      %s131 = ssub.s32 %s13, %s20
      %p132 = scmp.eq.s32.totalorder %s131, 0
      %s134 = sadd.s32 %s133, 1
      %s135 = scalar_select %p132, %s133, %s134
      %p138 = pneg %p132
      %p139 = scmp.eq.s32.totalorder %s13, 1
      %p140 = por %p138, %p139
      %p141 = scmp.ne.s32.totalorder %s133, %s136
      %p142 = scmp.eq.s32.totalorder %s13, 0
      %p143 = por %p141, %p142
      %p144 = scmp.ne.s32.totalorder %s133, %s136
      %p145 = scmp.eq.s32.totalorder %s18, 1
      %p146 = por %p144, %p145
      %p147 = scmp.ne.s32.totalorder %s136, %s137
      %p148 = scmp.eq.s32.totalorder %s18, 0
      %p149 = por %p147, %p148
      %p150 = scmp.ne.s32.totalorder %s136, %s137
      %p151 = scmp.eq.s32.totalorder %s19, 1
      %p152 = por %p150, %p151
      %p154 = scmp.ne.s32.totalorder %s137, %s153
      %p155 = scmp.eq.s32.totalorder %s19, 0
      %p156 = por %p154, %p155
      %p157 = scmp.le.s32.totalorder 1, %s13
      %p158 = scmp.lt.s32.totalorder %s13, 3
      %p159 = pnand %p157, %p158
      %p160 = pneg %p159
      // Predicated region
      $region9: #{_lambda_.7} parent=5 // pred_check
        _
      $region10: #{_lambda_.7} parent=5 // pred_check_branch
        %162 = sbr.rel (%p159) target = $region12
      $region11: #{_lambda_.7} parent=5 // pred_region
        %s163 = ssub.s32 %s13, 1
        // Predicated region
        $region13: #{_lambda_.7} parent=11 // pred_check
          %p164 = pneg %p60
        $region14: #{_lambda_.7} parent=11 // pred_check_branch
          %166 = sbr.rel (%p164) target = $region16
        $region15: #{_lambda_.7} parent=11 // pred_region
          _
        $region16: #{_lambda_.7} parent=11 // pred_fallthru
          _
        // Predicated region
        $region17: #{_lambda_.7} parent=11 // pred_check
          %p167 = pneg %p81
        $region18: #{_lambda_.7} parent=11 // pred_check_branch
          %169 = sbr.rel (%p167) target = $region20
        $region19: #{_lambda_.7} parent=11 // pred_region
          _
        $region20: #{_lambda_.7} parent=11 // pred_fallthru
          _
        // Predicated region
        $region21: #{_lambda_.7} parent=11 // pred_check
          %p170 = pneg %p102
        $region22: #{_lambda_.7} parent=11 // pred_check_branch
          %172 = sbr.rel (%p170) target = $region24
        $region23: #{_lambda_.7} parent=11 // pred_region
          _
        $region24: #{_lambda_.7} parent=11 // pred_fallthru
          _
        // Predicated region
        $region25: #{_lambda_.7} parent=11 // pred_check
          %p173 = pneg %p123
        $region26: #{_lambda_.7} parent=11 // pred_check_branch
          %175 = sbr.rel (%p173) target = $region28
        $region27: #{_lambda_.7} parent=11 // pred_region
          _
        $region28: #{_lambda_.7} parent=11 // pred_fallthru
          _
      $region12: #{_lambda_.7} parent=5 // pred_fallthru
        _
      %p176 = scmp.lt.s32.totalorder %s13, 2
      // Predicated region
      $region29: #{_lambda_.7} parent=5 // pred_check
        %p177 = pneg %p176
      $region30: #{_lambda_.7} parent=5 // pred_check_branch
        %179 = sbr.rel (%p177) target = $region32
      $region31: #{_lambda_.7} parent=5 // pred_region
        // Predicated region
        $region33: #{_lambda_.7} parent=31 // pred_check
          %p180 = pneg %p33
        $region34: #{_lambda_.7} parent=31 // pred_check_branch
          %182 = sbr.rel (%p180) target = $region36
        $region35: #{_lambda_.7} parent=31 // pred_region
          %s183 = sand.u32 %s23, 1
          %s184 = sand.u32 %s23, 1
          %s185 = smul.addr %s184, 64
          %s186 = scalar_lea.vmem [#allocation3], %s185
          %s187 = smul.u32 2, %s13
          %s188 = smul.addr %s187, 8
          %s189 = scalar_lea.vmem %s0, %s188
          // Predicated region
          $region37: #{_lambda_.7} parent=35 // pred_check
            _
          $region38: #{_lambda_.7} parent=35 // pred_check_branch
            %191 = sbr.rel (0) target = $region40
          $region39: #{_lambda_.7} parent=35 // pred_region
            // Predicated region
            $region41: #{_lambda_.7} parent=39 // pred_check
              _
            $region42: #{_lambda_.7} parent=39 // pred_check_branch
              %193 = sbr.rel (0) target = $region44
            $region43: #{_lambda_.7} parent=39 // pred_region
              loop: start=0, step=1, limit=1
              $region45: #{_lambda_.7} parent=43 // loop_pre_header
                _
              $region46: #{_lambda_.7} parent=43 // loop_header
                %s195 = sphi 0, %s199
                %p196 = scmp.ge.s32.totalorder %s195, 1
                %s200 = sphi %s189, %s189
                %s201 = sphi %s186, %s186
              $region47: #{_lambda_.7} parent=43 // loop_header_branch
                %198 = sbr.rel (%p196) target = $region51
              $region48: #{_lambda_.7} parent=43 // loop_body
                %v202 = vld [vmem:[%s200] sm:$0xff]
                %203 = vst [vmem:[%s201] sm:$0xff] %v202
                %v204 = vld [vmem:[%s200 + $0x8] sm:$0xff]
                %205 = vst [vmem:[%s201 + $0x8] sm:$0xff] %v204
                %v206 = vld [vmem:[%s200 + $0x20] sm:$0xff]
                %207 = vst [vmem:[%s201 + $0x10] sm:$0xff] %v206
                %v208 = vld [vmem:[%s200 + $0x28] sm:$0xff]
                %209 = vst [vmem:[%s201 + $0x18] sm:$0xff] %v208
                %v210 = vld [vmem:[%s200 + $0x40] sm:$0xff]
                %211 = vst [vmem:[%s201 + $0x20] sm:$0xff] %v210
                %v212 = vld [vmem:[%s200 + $0x48] sm:$0xff]
                %213 = vst [vmem:[%s201 + $0x28] sm:$0xff] %v212
                %v214 = vld [vmem:[%s200 + $0x60] sm:$0xff]
                %215 = vst [vmem:[%s201 + $0x30] sm:$0xff] %v214
                %v216 = vld [vmem:[%s200 + $0x68] sm:$0xff]
                %217 = vst [vmem:[%s201 + $0x38] sm:$0xff] %v216
              $region49: #{_lambda_.7} parent=43 // loop_footer
                %s199 = sadd.s32 1, %s195
              $region50: #{_lambda_.7} parent=43 // loop_footer_branch
                %194 = sbr.rel target = $region46
              $region51: #{_lambda_.7} parent=43 // loop_exit
                _
            $region44: #{_lambda_.7} parent=39 // pred_fallthru
              _
            // Predicated region
            $region52: #{_lambda_.7} parent=39 // pred_check
              _
            $region53: #{_lambda_.7} parent=39 // pred_check_branch
              %219 = sbr.rel target = $region55
            $region54: #{_lambda_.7} parent=39 // pred_region
              _
            $region55: #{_lambda_.7} parent=39 // pred_fallthru
              _
          $region40: #{_lambda_.7} parent=35 // pred_fallthru
            _
          %220 = vnop
        $region36: #{_lambda_.7} parent=31 // pred_fallthru
          _
      $region32: #{_lambda_.7} parent=5 // pred_fallthru
        _
      %p221 = scmp.le.s32.totalorder 1, %s13
      %p222 = scmp.lt.s32.totalorder %s13, 3
      %p223 = pnand %p221, %p222
      %p224 = pneg %p223
      // Predicated region
      $region56: #{_lambda_.7} parent=5 // pred_check
        _
      $region57: #{_lambda_.7} parent=5 // pred_check_branch
        %226 = sbr.rel (%p223) target = $region59
      $region58: #{_lambda_.7} parent=5 // pred_region
        %s227 = ssub.s32 %s13, 1
        %s228 = sand.u32 %s26, 1
        %s229 = sand.u32 %s26, 1
        %s230 = smul.addr %s229, 64
        %s231 = scalar_lea.vmem [#allocation3], %s230
        // Predicated region
        $region60: #{_lambda_.7} parent=58 // pred_check
          %p232 = pneg %p39
        $region61: #{_lambda_.7} parent=58 // pred_check_branch
          %234 = sbr.rel (%p232) target = $region63
        $region62: #{_lambda_.7} parent=58 // pred_region
          _
        $region63: #{_lambda_.7} parent=58 // pred_fallthru
          _
        %s235 = sand.u32 %s26, 1
        %s236 = sand.u32 %s26, 1
        %s237 = smul.addr %s236, 64
        %s238 = scalar_lea.vmem [#allocation3], %s237
        %p239 = pneg %p39
        %p240 = pneg %p36
        %p241 = pneg %p60
        %p242 = pneg %p57
        %p243 = pneg %p81
        %p244 = pneg %p78
        %p245 = pneg %p102
        %p246 = pneg %p99
        %p247 = pneg %p123
        %p248 = pneg %p120
        %p249 = pneg %p149
        %p250 = pneg %p146
        %s251 = smul.u32 2, %s18
        %p252 = scmp.lt.s32.totalorder %s251, 3
        %s253 = scalar_select %p252, %s251, 3
        %s254 = scalar_lea.vmem %s5, %s253
        %s255 = smul.u32 2, %s18
        %s256 = smul.u32 2, %s18
        %p257 = scmp.lt.s32.totalorder %s256, 3
        %s258 = scalar_select %p257, %s256, 3
        %s259 = scalar_lea.vmem %s5, %s258
        %s260 = smul.u32 2, %s18
        %v261 = vld [vmem:[%s1] sm:$0xff]
        %v262 = vld [vmem:[%s1 + $0x8] sm:$0xff]
        %v263 = vld [vmem:[%s1 + $0x10] sm:$0xff]
        %v264 = vld [vmem:[%s1 + $0x18] sm:$0xff]
        %v265 = vld [vmem:[%s1 + $0x20] sm:$0xff]
        %v266 = vld [vmem:[%s1 + $0x28] sm:$0xff]
        %v267 = vld [vmem:[%s1 + $0x30] sm:$0xff]
        %v268 = vld [vmem:[%s1 + $0x38] sm:$0xff]
        %v269 = vld [vmem:[%s231] sm:$0xff]
        %v270 = vld [vmem:[%s231 + $0x8] sm:$0xff]
        %v271 = vld [vmem:[%s231 + $0x10] sm:$0xff]
        %v272 = vld [vmem:[%s231 + $0x18] sm:$0xff]
        %v273 = vld [vmem:[%s231 + $0x20] sm:$0xff]
        %v274 = vld [vmem:[%s231 + $0x28] sm:$0xff]
        %v275 = vld [vmem:[%s231 + $0x30] sm:$0xff]
        %v276 = vld [vmem:[%s231 + $0x38] sm:$0xff]
        %v277 = vld [vmem:[%s2] sm:$0xff]
        %v278 = vld [vmem:[%s2 + $0x8] sm:$0xff]
        %v279 = vld [vmem:[%s2 + $0x10] sm:$0xff]
        %v280 = vld [vmem:[%s2 + $0x18] sm:$0xff]
        %v281 = vld [vmem:[%s2 + $0x20] sm:$0xff]
        %v282 = vld [vmem:[%s2 + $0x28] sm:$0xff]
        %v283 = vld [vmem:[%s2 + $0x30] sm:$0xff]
        %v284 = vld [vmem:[%s2 + $0x38] sm:$0xff]
        %286 = vset.pattern.permute.xlu0 0
        %287 = vperm.xlu0 %286, %v277
        %v288 = vpop.permute.xlu0 %287
        %291 = vset.pattern.permute.xlu0 0
        %292 = vperm.xlu0 %291, %v278
        %v293 = vpop.permute.xlu0 %292
        %296 = vset.pattern.permute.xlu0 0
        %297 = vperm.xlu0 %296, %v279
        %v298 = vpop.permute.xlu0 %297
        %301 = vset.pattern.permute.xlu0 0
        %302 = vperm.xlu0 %301, %v280
        %v303 = vpop.permute.xlu0 %302
        %306 = vset.pattern.permute.xlu0 0
        %307 = vperm.xlu0 %306, %v281
        %v308 = vpop.permute.xlu0 %307
        %311 = vset.pattern.permute.xlu0 0
        %312 = vperm.xlu0 %311, %v282
        %v313 = vpop.permute.xlu0 %312
        %316 = vset.pattern.permute.xlu0 0
        %317 = vperm.xlu0 %316, %v283
        %v318 = vpop.permute.xlu0 %317
        %321 = vset.pattern.permute.xlu0 0
        %322 = vperm.xlu0 %321, %v284
        %v323 = vpop.permute.xlu0 %322
        %vm325 = vcmask 261120
        %v327 = vsel %vm325, %v261, 0
        %v330 = vsel %vm325, %v262, 0
        %v333 = vsel %vm325, %v263, 0
        %v336 = vsel %vm325, %v264, 0
        %v339 = vsel %vm325, %v265, 0
        %v342 = vsel %vm325, %v266, 0
        %v345 = vsel %vm325, %v267, 0
        %v348 = vsel %vm325, %v268, 0
        %350 = vmatpush.msra.mxu0 0.0
        %351 = vmatpush.msra.mxu0 0.0
        %352 = vmatpush.msra.mxu0 0.0
        %353 = vmatpush.msra.mxu0 0.0
        %354 = vmatpush.msra.mxu0 0.0
        %355 = vmatpush.msra.mxu0 0.0
        %356 = vmatpush.msra.mxu0 0.0
        %357 = vmatpush.msra.mxu0 0.0
        %358 = vmatpush.msra.mxu0 0.0
        %359 = vmatpush.msra.mxu0 0.0
        %360 = vmatpush.msra.mxu0 0.0
        %361 = vmatpush.msra.mxu0 0.0
        %362 = vmatpush.msra.mxu0 %v275
        %363 = vmatpush.msra.mxu0 %v273
        %364 = vmatpush.msra.mxu0 %v271
        %365 = vmatpush.msra.mxu0 %v269
        %366 = vmatmul.f32.gmra.mxu0 %v327
        %v367 = vpop.f32.mrf.mxu0
        %v368 = vadd.f32 %v288, %v367
        %369 = vmatmul.f32.gmra.mxu0 %v330
        %v370 = vpop.f32.mrf.mxu0
        %v371 = vadd.f32 %v293, %v370
        %372 = vmatmul.f32.gmra.mxu0 %v333
        %v373 = vpop.f32.mrf.mxu0
        %v374 = vadd.f32 %v298, %v373
        %375 = vmatmul.f32.gmra.mxu0 %v336
        %v376 = vpop.f32.mrf.mxu0
        %v377 = vadd.f32 %v303, %v376
        %378 = vmatmul.f32.gmra.mxu0 %v339
        %v379 = vpop.f32.mrf.mxu0
        %v380 = vadd.f32 %v308, %v379
        %381 = vmatmul.f32.gmra.mxu0 %v342
        %v382 = vpop.f32.mrf.mxu0
        %v383 = vadd.f32 %v313, %v382
        %384 = vmatmul.f32.gmra.mxu0 %v345
        %v385 = vpop.f32.mrf.mxu0
        %v386 = vadd.f32 %v318, %v385
        %387 = vmatmul.f32.gmra.mxu0 %v348
        %v388 = vpop.f32.mrf.mxu0
        %v389 = vadd.f32 %v323, %v388
        %390 = vdwg.mxu0
        %391 = vmatpush.msra.mxu0 0.0
        %392 = vmatpush.msra.mxu0 0.0
        %393 = vmatpush.msra.mxu0 0.0
        %394 = vmatpush.msra.mxu0 0.0
        %395 = vmatpush.msra.mxu0 0.0
        %396 = vmatpush.msra.mxu0 0.0
        %397 = vmatpush.msra.mxu0 0.0
        %398 = vmatpush.msra.mxu0 0.0
        %399 = vmatpush.msra.mxu0 0.0
        %400 = vmatpush.msra.mxu0 0.0
        %401 = vmatpush.msra.mxu0 0.0
        %402 = vmatpush.msra.mxu0 0.0
        %403 = vmatpush.msra.mxu0 %v276
        %404 = vmatpush.msra.mxu0 %v274
        %405 = vmatpush.msra.mxu0 %v272
        %406 = vmatpush.msra.mxu0 %v270
        %407 = vmatmul.f32.gmra.mxu0 %v327
        %v408 = vpop.f32.mrf.mxu0
        %v409 = vadd.f32 %v288, %v408
        %410 = vmatmul.f32.gmra.mxu0 %v330
        %v411 = vpop.f32.mrf.mxu0
        %v412 = vadd.f32 %v293, %v411
        %413 = vmatmul.f32.gmra.mxu0 %v333
        %v414 = vpop.f32.mrf.mxu0
        %v415 = vadd.f32 %v298, %v414
        %416 = vmatmul.f32.gmra.mxu0 %v336
        %v417 = vpop.f32.mrf.mxu0
        %v418 = vadd.f32 %v303, %v417
        %419 = vmatmul.f32.gmra.mxu0 %v339
        %v420 = vpop.f32.mrf.mxu0
        %v421 = vadd.f32 %v308, %v420
        %422 = vmatmul.f32.gmra.mxu0 %v342
        %v423 = vpop.f32.mrf.mxu0
        %v424 = vadd.f32 %v313, %v423
        %425 = vmatmul.f32.gmra.mxu0 %v345
        %v426 = vpop.f32.mrf.mxu0
        %v427 = vadd.f32 %v318, %v426
        %428 = vmatmul.f32.gmra.mxu0 %v348
        %v429 = vpop.f32.mrf.mxu0
        %v430 = vadd.f32 %v323, %v429
        %431 = vdwg.mxu0
        %v432 = vmax.f32 %v368, 0.0
        %v433 = vmax.f32 %v409, 0.0
        %v434 = vmax.f32 %v371, 0.0
        %v435 = vmax.f32 %v412, 0.0
        %v436 = vmax.f32 %v374, 0.0
        %v437 = vmax.f32 %v415, 0.0
        %v438 = vmax.f32 %v377, 0.0
        %v439 = vmax.f32 %v418, 0.0
        %v440 = vmax.f32 %v380, 0.0
        %v441 = vmax.f32 %v421, 0.0
        %v442 = vmax.f32 %v383, 0.0
        %v443 = vmax.f32 %v424, 0.0
        %v444 = vmax.f32 %v386, 0.0
        %v445 = vmax.f32 %v427, 0.0
        %v446 = vmax.f32 %v389, 0.0
        %v447 = vmax.f32 %v430, 0.0
        %v448 = vld [vmem:[%s3] sm:$0x1]
        %v449 = vld [vmem:[#allocation2] sm:$0x1]
        %451 = vset.pattern.permute.xlu0 0
        %452 = vperm.xlu0 %451, %v449
        %v453 = vpop.permute.xlu0 %452
        %v455 = vperm.slane %v453, 0
        %vm456 = vcmask 523264
        %v458 = vsel %vm456, %v448, 0
        %460 = vmatpush.msra.mxu0 0.0
        %461 = vmatpush.msra.mxu0 0.0
        %462 = vmatpush.msra.mxu0 0.0
        %463 = vmatpush.msra.mxu0 0.0
        %464 = vmatpush.msra.mxu0 0.0
        %465 = vmatpush.msra.mxu0 0.0
        %466 = vmatpush.msra.mxu0 0.0
        %467 = vmatpush.msra.mxu0 0.0
        %468 = vmatpush.msra.mxu0 %v446
        %469 = vmatpush.msra.mxu0 %v444
        %470 = vmatpush.msra.mxu0 %v442
        %471 = vmatpush.msra.mxu0 %v440
        %472 = vmatpush.msra.mxu0 %v438
        %473 = vmatpush.msra.mxu0 %v436
        %474 = vmatpush.msra.mxu0 %v434
        %475 = vmatpush.msra.mxu0 %v432
        %476 = vmatmul.f32.gmra.mxu0 %v458
        %v477 = vpop.f32.mrf.mxu0
        %v478 = vadd.f32 %v455, %v477
        %479 = vdwg.mxu0
        %480 = vmatpush.msra.mxu0 0.0
        %481 = vmatpush.msra.mxu0 0.0
        %482 = vmatpush.msra.mxu0 0.0
        %483 = vmatpush.msra.mxu0 0.0
        %484 = vmatpush.msra.mxu0 0.0
        %485 = vmatpush.msra.mxu0 0.0
        %486 = vmatpush.msra.mxu0 0.0
        %487 = vmatpush.msra.mxu0 0.0
        %488 = vmatpush.msra.mxu0 %v447
        %489 = vmatpush.msra.mxu0 %v445
        %490 = vmatpush.msra.mxu0 %v443
        %491 = vmatpush.msra.mxu0 %v441
        %492 = vmatpush.msra.mxu0 %v439
        %493 = vmatpush.msra.mxu0 %v437
        %494 = vmatpush.msra.mxu0 %v435
        %495 = vmatpush.msra.mxu0 %v433
        %496 = vmatmul.f32.gmra.mxu0 %v458
        %v497 = vpop.f32.mrf.mxu0
        %v498 = vadd.f32 %v455, %v497
        %499 = vdwg.mxu0
        %v502 = vrot.slane %v498, 7
        %vm503 = vcmask 1040384
        %v504 = vsel %vm503, %v478, %v502
        %v506 = vlaneseq
        %vm507 = vcmp.ge.s32.totalorder %v506, 0
        %vm508 = vcmp.lt.s32.totalorder %v506, 256
        %vm509 = vmand %vm507, %vm508
        %510 = vst.msk [vmem:[%s259] sm:$0x3] %vm509, %v504
        %s511 = smul.u32 2, %s18
        %p512 = scmp.lt.s32.totalorder %s511, 3
        %s513 = scalar_select %p512, %s511, 3
        %s514 = scalar_lea.vmem %s5, %s513
        // Predicated region
        $region64: #{_lambda_.7} parent=58 // pred_check
          %p515 = pneg %p146
        $region65: #{_lambda_.7} parent=58 // pred_check_branch
          %517 = sbr.rel (%p515) target = $region67
        $region66: #{_lambda_.7} parent=58 // pred_region
          %s518 = smul.u32 2, %s18
        $region67: #{_lambda_.7} parent=58 // pred_fallthru
          _
      $region59: #{_lambda_.7} parent=5 // pred_fallthru
        _
      %p519 = scmp.le.s32.totalorder 2, %s13
      // Predicated region
      $region68: #{_lambda_.7} parent=5 // pred_check
        %p520 = pneg %p519
      $region69: #{_lambda_.7} parent=5 // pred_check_branch
        %522 = sbr.rel (%p520) target = $region71
      $region70: #{_lambda_.7} parent=5 // pred_region
        %s523 = ssub.s32 %s13, 2
        // Predicated region
        $region72: #{_lambda_.7} parent=70 // pred_check
          %p524 = pneg %p152
        $region73: #{_lambda_.7} parent=70 // pred_check_branch
          %526 = sbr.rel (%p524) target = $region75
        $region74: #{_lambda_.7} parent=70 // pred_region
          %s527 = smul.u32 2, %s19
          %p528 = scmp.lt.s32.totalorder %s527, 3
          %s529 = scalar_select %p528, %s527, 3
          %s530 = scalar_lea.vmem %s5, %s529
        $region75: #{_lambda_.7} parent=70 // pred_fallthru
          _
      $region71: #{_lambda_.7} parent=5 // pred_fallthru
        _
    $region6: #{_lambda_.7} parent=1 // loop_footer
      %s17 = sadd.s32 1, %s13
    $region7: #{_lambda_.7} parent=1 // loop_footer_branch
      %12 = sbr.rel target = $region3
    $region8: #{_lambda_.7} parent=1 // loop_exit
      _

</llo_original>
